<compile_context>
chip_gen: v6e
topology: v6e:2x2x1
jax: 0.10.0
libtpu: 0.0.40
codegen_flags: <defaults>
</compile_context>

<pallas_src>
import functools

import jax
import jax.numpy as jnp
from jax.experimental import pallas as pl
from jax.experimental.pallas import tpu as pltpu


# ------------------------------ small helpers ------------------------------

def _round_up(a, b):
    return ((a + b - 1) // b) * b


def _vmem_spec():
    return pl.BlockSpec(memory_space=pltpu.MemorySpace.VMEM)


def _pad2(a, rows, cols):
    out = jnp.zeros((rows, cols), a.dtype)
    return out.at[: a.shape[0], : a.shape[1]].set(a)


def _vmem_limit_bytes():
    """~3/4 of physical VMEM (v5e/v6e: ~96 MiB, v7x: ~48 MiB), capped 100 MiB."""
    cap = 64 * 1024 * 1024
    try:
        cap = int(getattr(pltpu.get_tpu_info(), "vmem_capacity_bytes", cap)) or cap
    except Exception:
        pass
    return int(min(cap * 3 // 4, 100 * 1024 * 1024))


def _pick_tile(np_dim):
    for t in (1024, 512, 256, 128):
        if np_dim % t == 0:
            return t
    return 128


# --------------------------- fused (small-N) path ---------------------------

def _gin_fused_kernel(x_ref, adj_ref, pmat_ref, bias0_ref,
                      fw1_ref, fc1_ref, fw2_ref, fc2_ref,
                      nw1_ref, nc1_ref, nw2_ref, nc2_ref,
                      lw_ref, lb_ref, out_ref,
                      *, no_layers, classification):
    """Whole GIN forward for one (padded) batch, fully resident in VMEM.

    x_ref    : [Np, Fp] bf16   node features
    adj_ref  : [Np, Np] bf16   adjacency with (1+eps)*I folded in
    pmat_ref : [Gp, Np] bf16   one-hot sum-pooling matrix
    bias0_ref: [Gp, Tp] f32    counts * linears[0].bias (pool-first rewrite)
    fw*/fc*  : first_h MLP (BN folded), bf16 weights / f32 biases
    nw*/nc*  : [L-1, ...] stacked GINConv MLPs
    lw/lb    : [L, Hp, Tp] bf16 / [L, 1, Tp] f32 per-layer output linears
    out_ref  : [Gp, Tp] f32
    """
    adj = adj_ref[...]
    pmat = pmat_ref[...]

    def mlp2(z_bf16, w1, c1, w2, c2):
        a = jnp.dot(z_bf16, w1, preferred_element_type=jnp.float32) + c1
        a = jnp.maximum(a, 0.0).astype(jnp.bfloat16)
        b = jnp.dot(a, w2, preferred_element_type=jnp.float32) + c2
        return jnp.maximum(b, 0.0).astype(jnp.bfloat16)

    # layer 0: first_h, then pool-before-linear (bias pre-scaled by counts)
    h = mlp2(x_ref[...], fw1_ref[...], fc1_ref[...], fw2_ref[...], fc2_ref[...])
    pooled0 = jnp.dot(pmat, h, preferred_element_type=jnp.float32)     # [Gp, Hp]
    out = jnp.dot(pooled0.astype(jnp.bfloat16), lw_ref[0],
                  preferred_element_type=jnp.float32) + bias0_ref[...]

    # layers 1..L-1: z = adj' @ h (self term folded into adj'), MLP, pool+lin
    for l in range(1, no_layers):
        z = jnp.dot(adj, h, preferred_element_type=jnp.float32).astype(jnp.bfloat16)
        h = mlp2(z, nw1_ref[l - 1], nc1_ref[l - 1], nw2_ref[l - 1], nc2_ref[l - 1])
        pooled = jnp.dot(pmat, h, preferred_element_type=jnp.float32)  # [Gp, Hp]
        out = out + (jnp.dot(pooled.astype(jnp.bfloat16), lw_ref[l],
                             preferred_element_type=jnp.float32) + lb_ref[l])

    if classification:  # eval mode -> sigmoid (approx reciprocal on the EUP)
        out = pl.reciprocal(1.0 + jnp.exp(-out), approx=True)
    out_ref[...] = out


# --------------------------- tiled (large-N) path ---------------------------

def _node_mlp_kernel(x_ref, w1_ref, c1_ref, w2_ref, c2_ref, h_ref):
    """first_h MLP on one row tile of nodes."""
    a = jnp.dot(x_ref[...], w1_ref[...], preferred_element_type=jnp.float32) + c1_ref[...]
    a = jnp.maximum(a, 0.0).astype(jnp.bfloat16)
    b = jnp.dot(a, w2_ref[...], preferred_element_type=jnp.float32) + c2_ref[...]
    h_ref[...] = jnp.maximum(b, 0.0).astype(jnp.bfloat16)


def _gin_layer_kernel(adj_ref, h_ref, w1_ref, c1_ref, w2_ref, c2_ref,
                      out_ref, acc_ref):
    """One GINConv layer: tiled z = adj' @ h, MLP fused into the last k step."""
    @pl.when(pl.program_id(1) == 0)
    def _():
        acc_ref[...] = jnp.zeros_like(acc_ref)

    acc_ref[...] += jnp.dot(adj_ref[...], h_ref[...],
                            preferred_element_type=jnp.float32)

    @pl.when(pl.program_id(1) == pl.num_programs(1) - 1)
    def _():
        z = acc_ref[...].astype(jnp.bfloat16)
        a = jnp.dot(z, w1_ref[...], preferred_element_type=jnp.float32) + c1_ref[...]
        a = jnp.maximum(a, 0.0).astype(jnp.bfloat16)
        b = jnp.dot(a, w2_ref[...], preferred_element_type=jnp.float32) + c2_ref[...]
        out_ref[...] = jnp.maximum(b, 0.0).astype(jnp.bfloat16)


def _pool_linear_kernel(pmat_ref, h_ref, lw_ref, bias_ref, acc_ref, out_ref,
                        *, apply_sigmoid):
    """out = acc + (pmat @ h) @ lw + bias  (+ optional sigmoid epilogue)."""
    pooled = jnp.dot(pmat_ref[...], h_ref[...], preferred_element_type=jnp.float32)
    out = acc_ref[...] + jnp.dot(pooled.astype(jnp.bfloat16), lw_ref[...],
                                 preferred_element_type=jnp.float32) + bias_ref[...]
    if apply_sigmoid:
        out = pl.reciprocal(1.0 + jnp.exp(-out), approx=True)
    out_ref[...] = out


def _gin_tiled_forward(x_p, adj_p, pmat, bias0, params, *, no_layers,
                       classification, vmem_limit):
    Np, Fp = x_p.shape
    Hp = params["fw1"].shape[1]
    Tp = params["lw"].shape[2]
    Gp = pmat.shape[0]
    tm = tk = _pick_tile(Np)

    cp_rows = pltpu.CompilerParams(dimension_semantics=("parallel",),
                                   vmem_limit_bytes=vmem_limit)
    cp_mm = pltpu.CompilerParams(dimension_semantics=("parallel", "arbitrary"),
                                 vmem_limit_bytes=vmem_limit)
    cp_small = pltpu.CompilerParams(vmem_limit_bytes=vmem_limit)

    # first_h MLP, tiled over node rows (megacore-parallel on v7x)
    h = pl.pallas_call(
        _node_mlp_kernel,
        out_shape=jax.ShapeDtypeStruct((Np, Hp), jnp.bfloat16),
        grid=(Np // tm,),
        in_specs=[pl.BlockSpec((tm, Fp), lambda i: (i, 0)),
                  pl.BlockSpec((Fp, Hp), lambda i: (0, 0)),
                  pl.BlockSpec((1, Hp), lambda i: (0, 0)),
                  pl.BlockSpec((Hp, Hp), lambda i: (0, 0)),
                  pl.BlockSpec((1, Hp), lambda i: (0, 0))],
        out_specs=pl.BlockSpec((tm, Hp), lambda i: (i, 0)),
        compiler_params=cp_rows,
    )(x_p, params["fw1"], params["fc1"], params["fw2"], params["fc2"])

    def pool_linear(h_cur, lw_l, bias_l, acc, apply_sigmoid):
        return pl.pallas_call(
            functools.partial(_pool_linear_kernel, apply_sigmoid=apply_sigmoid),
            out_shape=jax.ShapeDtypeStruct((Gp, Tp), jnp.float32),
            in_specs=[_vmem_spec()] * 5,
            out_specs=_vmem_spec(),
            compiler_params=cp_small,
        )(pmat, h_cur, lw_l, bias_l, acc)

    out = jnp.zeros((Gp, Tp), jnp.float32)
    out = pool_linear(h, params["lw"][0], bias0, out,
                      classification and no_layers == 1)

    for l in range(1, no_layers):
        # TODO(synk): for very large graphs store adj' as int8 (v5e/v6e) or
        # fp8 (v7x) in HBM and upcast per tile to halve the dominant adj DMA.
        h = pl.pallas_call(
            _gin_layer_kernel,
            out_shape=jax.ShapeDtypeStruct((Np, Hp), jnp.bfloat16),
            grid=(Np // tm, Np // tk),
            in_specs=[pl.BlockSpec((tm, tk), lambda i, k: (i, k)),
                      pl.BlockSpec((tk, Hp), lambda i, k: (k, 0)),
                      pl.BlockSpec((Hp, Hp), lambda i, k: (0, 0)),
                      pl.BlockSpec((1, Hp), lambda i, k: (0, 0)),
                      pl.BlockSpec((Hp, Hp), lambda i, k: (0, 0)),
                      pl.BlockSpec((1, Hp), lambda i, k: (0, 0))],
            out_specs=pl.BlockSpec((tm, Hp), lambda i, k: (i, 0)),
            scratch_shapes=[pltpu.VMEM((tm, Hp), jnp.float32)],
            compiler_params=cp_mm,
        )(adj_p, h, params["nw1"][l - 1], params["nc1"][l - 1],
          params["nw2"][l - 1], params["nc2"][l - 1])

        bias_l = jnp.broadcast_to(params["lb"][l], (Gp, Tp))
        out = pool_linear(h, params["lw"][l], bias_l, out,
                          classification and l == no_layers - 1)
    return out


# ------------------------------ param setup --------------------------------

def _dense_init(key, din, dout, scale=0.1):
    kw, kb = jax.random.split(key)
    w = scale * jax.random.normal(kw, (din, dout), jnp.float32)
    b = scale * jax.random.normal(kb, (dout,), jnp.float32)
    return w, b


def _bn_init(key, dim):
    kg, kb, km, kv = jax.random.split(key, 4)
    gamma = 1.0 + 0.1 * jax.random.normal(kg, (dim,), jnp.float32)
    beta = 0.1 * jax.random.normal(kb, (dim,), jnp.float32)
    mean = 0.1 * jax.random.normal(km, (dim,), jnp.float32)
    var = 1.0 + 0.1 * jax.nn.softplus(jax.random.normal(kv, (dim,), jnp.float32))
    return gamma, beta, mean, var


def _fold_bn(w, b, gamma, beta, mean, var, eps=1e-5):
    # eval-mode BN folded into linear: y = (xW + b - mu)/sqrt(var+eps)*g + beta
    s = gamma / jnp.sqrt(var + eps)
    w_f = w * s[None, :]
    c = (b - mean) * s + beta
    return w_f, c.reshape(1, -1)


def init_gin_params(key, dim_features, dim_target, hidden_size, num_layers):
    assert num_layers >= 1
    Fp = _round_up(dim_features, 128)
    Hp = _round_up(hidden_size, 128)
    Tp = _round_up(dim_target, 128)
    no_layers = num_layers + 1
    keys = jax.random.split(key, 2 * no_layers)

    def mlp_block(k, din, dout, din_p, dout_p):
        k1, k2, k3, k4 = jax.random.split(k, 4)
        w1, b1 = _dense_init(k1, din, dout)
        w2, b2 = _dense_init(k3, dout, dout)
        w1f, c1 = _fold_bn(w1, b1, *_bn_init(k2, dout))
        w2f, c2 = _fold_bn(w2, b2, *_bn_init(k4, dout))
        return (_pad2(w1f, din_p, dout_p).astype(jnp.bfloat16),
                _pad2(c1, 1, dout_p),
                _pad2(w2f, dout_p, dout_p).astype(jnp.bfloat16),
                _pad2(c2, 1, dout_p))

    fw1, fc1, fw2, fc2 = mlp_block(keys[0], dim_features, hidden_size, Fp, Hp)
    nblocks = [mlp_block(keys[l], hidden_size, hidden_size, Hp, Hp)
               for l in range(1, no_layers)]
    nw1 = jnp.stack([b[0] for b in nblocks])
    nc1 = jnp.stack([b[1] for b in nblocks])
    nw2 = jnp.stack([b[2] for b in nblocks])
    nc2 = jnp.stack([b[3] for b in nblocks])

    lws, lbs = [], []
    for l in range(no_layers):
        w, b = _dense_init(keys[no_layers + l], hidden_size, dim_target)
        lws.append(_pad2(w, Hp, Tp).astype(jnp.bfloat16))
        lbs.append(_pad2(b.reshape(1, -1), 1, Tp))
    lw = jnp.stack(lws)
    lb = jnp.stack(lbs)

    return {"fw1": fw1, "fc1": fc1, "fw2": fw2, "fc2": fc2,
            "nw1": nw1, "nc1": nc1, "nw2": nw2, "nc2": nc2,
            "lw": lw, "lb": lb}


# ------------------------------ forward pass --------------------------------

def _pad_inputs(x, adj, batch, num_graphs, Fp, eps):
    """Lane/sublane-aligned zero padding (math-preserving) + self-loop fold."""
    N = x.shape[0]
    Np = _round_up(max(N, 8), 128)
    Gp = _round_up(max(num_graphs, 1), 8)
    x_p = jnp.zeros((Np, Fp), jnp.bfloat16).at[:N, : x.shape[1]].set(
        x.astype(jnp.bfloat16))
    adj_p = jnp.zeros((Np, Np), jnp.float32).at[:N, :N].set(adj.astype(jnp.float32))
    # fold the GIN self term (1+eps)*I into the adjacency: z = adj' @ h
    idx = jnp.arange(Np)
    adj_p = adj_p.at[idx, idx].add(1.0 + eps).astype(jnp.bfloat16)
    batch_p = jnp.full((Np,), -1, jnp.int32).at[:N].set(batch.astype(jnp.int32))
    onehot = jnp.arange(Gp, dtype=jnp.int32)[:, None] == batch_p[None, :]
    pmat = onehot.astype(jnp.bfloat16)                        # exact 0/1 in bf16
    counts = jnp.sum(onehot, axis=1, keepdims=True).astype(jnp.float32)  # [Gp, 1]
    return x_p, adj_p, pmat, counts


def gin_forward(x, adj, batch, params, *, num_graphs, dim_target,
                eps=0.0, classification=True, force_tiled=False):
    """GIN.forward (inference, sum aggregation) via Pallas TPU kernels."""
    Fp = params["fw1"].shape[0]
    Hp = params["fw1"].shape[1]
    Tp = params["lw"].shape[2]
    no_layers = params["lw"].shape[0]

    x_p, adj_p, pmat, counts = _pad_inputs(x, adj, batch, num_graphs, Fp, eps)
    Np = x_p.shape[0]
    Gp = pmat.shape[0]
    bias0 = counts * params["lb"][0]          # [Gp, Tp] pool-first exact rewrite

    vmem_limit = _vmem_limit_bytes()
    # fused path only while the whole adjacency comfortably fits in VMEM
    use_tiled = force_tiled or (2 * Np * Np > vmem_limit // 4)

    if use_tiled:
        out_p = _gin_tiled_forward(x_p, adj_p, pmat, bias0, params,
                                   no_layers=no_layers,
                                   classification=classification,
                                   vmem_limit=vmem_limit)
        return out_p[:num_graphs, :dim_target]

    args = (x_p, adj_p, pmat, bias0,
            params["fw1"], params["fc1"], params["fw2"], params["fc2"],
            params["nw1"], params["nc1"], params["nw2"], params["nc2"],
            params["lw"], params["lb"])

    # advisory cost estimate for XLA scheduling around the custom call
    flops = 2 * Np * (Fp + Hp) * Hp + 2 * Gp * Np * Hp + 2 * Gp * Hp * Tp
    flops += (no_layers - 1) * (2 * Np * Np * Hp + 4 * Np * Hp * Hp
                                + 2 * Gp * Np * Hp + 2 * Gp * Hp * Tp)
    bytes_accessed = sum(int(a.size) * a.dtype.itemsize for a in args) + Gp * Tp * 4

    out_p = pl.pallas_call(
        functools.partial(_gin_fused_kernel, no_layers=no_layers,
                          classification=classification),
        out_shape=jax.ShapeDtypeStruct((Gp, Tp), jnp.float32),
        in_specs=[_vmem_spec()] * len(args),
        out_specs=_vmem_spec(),
        compiler_params=pltpu.CompilerParams(vmem_limit_bytes=vmem_limit),
        cost_estimate=pl.CostEstimate(flops=int(flops),
                                      transcendentals=int(Gp * Tp),
                                      bytes_accessed=int(bytes_accessed)),
    )(*args)
    return out_p[:num_graphs, :dim_target]


# --------------------------- plain-JAX reference ----------------------------

def gin_reference(x, adj, batch, params, *, num_graphs, eps, classification):
    """f32 reference of the original module math (unfused, no folds)."""
    f32 = lambda a: a.astype(jnp.float32)
    N = x.shape[0]
    Fp = params["fw1"].shape[0]
    xf = jnp.zeros((N, Fp), jnp.float32).at[:, : x.shape[1]].set(f32(x))
    adjf = f32(adj)
    pmat = (jnp.arange(num_graphs)[:, None] == batch[None, :]).astype(jnp.float32)

    def mlp(z, w1, c1, w2, c2):
        h = jnp.maximum(z @ f32(w1) + c1, 0.0)
        return jnp.maximum(h @ f32(w2) + c2, 0.0)

    h = mlp(xf, params["fw1"], params["fc1"], params["fw2"], params["fc2"])
    out = pmat @ (h @ f32(params["lw"][0]) + params["lb"][0])
    no_layers = params["lw"].shape[0]
    for l in range(1, no_layers):
        z = (1.0 + eps) * h + adjf @ h
        h = mlp(z, params["nw1"][l - 1], params["nc1"][l - 1],
                params["nw2"][l - 1], params["nc2"][l - 1])
        out = out + (pmat @ h) @ f32(params["lw"][l]) + params["lb"][l]
    if classification:
        out = jax.nn.sigmoid(out)
    return out


# ----------------------------------- main -----------------------------------

if __name__ == "__main__":
    dim_features, dim_target, hidden_size, num_layers = 16, 4, 32, 3

    key = jax.random.PRNGKey(0)
    kp, k1, k2 = jax.random.split(key, 3)
    params = init_gin_params(kp, dim_features, dim_target, hidden_size,
                             num_layers)

    def make_batch(k, sizes, num_edges):
        n = int(sum(sizes))
        kx, ks, kd = jax.random.split(k, 3)
        x = jax.random.normal(kx, (n, dim_features), jnp.float32)
        batch = jnp.concatenate(
            [jnp.full((s,), g, jnp.int32) for g, s in enumerate(sizes)])
        src = jax.random.randint(ks, (num_edges,), 0, n)
        dst = jax.random.randint(kd, (num_edges,), 0, n)
        adj = jnp.zeros((n, n), jnp.float32).at[dst, src].add(1.0)  # adj[dst,src]
        return x, adj, batch, len(sizes)

    def run_and_check(x, adj, batch, g, *, force_tiled, atol):
        fwd = jax.jit(functools.partial(
            gin_forward, num_graphs=g, dim_target=dim_target, eps=0.0,
            classification=True, force_tiled=force_tiled))
        out = jax.block_until_ready(fwd(x, adj, batch, params))
        assert out.shape == (g, dim_target), out.shape
        assert bool(jnp.all(jnp.isfinite(out)))
        ref = gin_reference(x, adj, batch, params, num_graphs=g, eps=0.0,
                            classification=True)[:, :dim_target]
        assert bool(jnp.allclose(out, ref, atol=atol)), (out, ref)

    # small batch -> fully-VMEM-resident fused kernel
    run_and_check(*make_batch(k1, (20, 28), 160), force_tiled=False, atol=0.15)
    # larger batch -> tiled / pipelined per-layer path (row-parallel adj @ h)
    run_and_check(*make_batch(k2, (100, 120, 80), 900), force_tiled=True,
                  atol=0.15)

    print("KERNEL_OK")
</pallas_src>

<mosaic_0001>
module attributes {stable_mosaic.version = 11 : i64} {
  func.func private @main(%arg0: i32) attributes {dimension_semantics = [#tpu.dimension_semantics<core_parallel>], iteration_bounds = array<i64: 2>, tpu.core_type = #tpu.core_type<sc_scalar_subcore>, window_params = []} {
    return
  }
}

module attributes {stable_mosaic.version = 11 : i64} {
  func.func private @main(%arg0: i32) attributes {dimension_semantics = [#tpu.dimension_semantics<core_parallel>], iteration_bounds = array<i64: 2>, tpu.core_type = #tpu.core_type<sc_scalar_subcore>, window_params = []} {
    return
  }
}

module attributes {stable_mosaic.version = 11 : i64} {
  func.func @_gin_fused_kernel(%arg0: memref<128x128xbf16, #tpu.memory_space<vmem>>, %arg1: memref<128x128xbf16, #tpu.memory_space<vmem>>, %arg2: memref<8x128xbf16, #tpu.memory_space<vmem>>, %arg3: memref<8x128xf32, #tpu.memory_space<vmem>>, %arg4: memref<128x128xbf16, #tpu.memory_space<vmem>>, %arg5: memref<1x128xf32, #tpu.memory_space<vmem>>, %arg6: memref<128x128xbf16, #tpu.memory_space<vmem>>, %arg7: memref<1x128xf32, #tpu.memory_space<vmem>>, %arg8: memref<3x128x128xbf16, #tpu.memory_space<vmem>>, %arg9: memref<3x1x128xf32, #tpu.memory_space<vmem>>, %arg10: memref<3x128x128xbf16, #tpu.memory_space<vmem>>, %arg11: memref<3x1x128xf32, #tpu.memory_space<vmem>>, %arg12: memref<4x128x128xbf16, #tpu.memory_space<vmem>>, %arg13: memref<4x1x128xf32, #tpu.memory_space<vmem>>, %arg14: memref<8x128xf32, #tpu.memory_space<vmem>>) attributes {dimension_semantics = [], scalar_prefetch = 0 : i64, scratch_operands = 0 : i64, tpu.core_type = #tpu.core_type<tc>} {
    %c0 = arith.constant 0 : index
    %c0_0 = arith.constant 0 : index
    %0 = vector.load %arg1[%c0, %c0_0] : memref<128x128xbf16, #tpu.memory_space<vmem>>, vector<128x128xbf16>
    %c0_1 = arith.constant 0 : index
    %c0_2 = arith.constant 0 : index
    %1 = vector.load %arg2[%c0_1, %c0_2] : memref<8x128xbf16, #tpu.memory_space<vmem>>, vector<8x128xbf16>
    %c0_3 = arith.constant 0 : index
    %c0_4 = arith.constant 0 : index
    %2 = vector.load %arg0[%c0_3, %c0_4] : memref<128x128xbf16, #tpu.memory_space<vmem>>, vector<128x128xbf16>
    %c0_5 = arith.constant 0 : index
    %c0_6 = arith.constant 0 : index
    %3 = vector.load %arg4[%c0_5, %c0_6] : memref<128x128xbf16, #tpu.memory_space<vmem>>, vector<128x128xbf16>
    %c0_7 = arith.constant 0 : index
    %c0_8 = arith.constant 0 : index
    %4 = vector.load %arg5[%c0_7, %c0_8] : memref<1x128xf32, #tpu.memory_space<vmem>>, vector<1x128xf32>
    %c0_9 = arith.constant 0 : index
    %c0_10 = arith.constant 0 : index
    %5 = vector.load %arg6[%c0_9, %c0_10] : memref<128x128xbf16, #tpu.memory_space<vmem>>, vector<128x128xbf16>
    %c0_11 = arith.constant 0 : index
    %c0_12 = arith.constant 0 : index
    %6 = vector.load %arg7[%c0_11, %c0_12] : memref<1x128xf32, #tpu.memory_space<vmem>>, vector<1x128xf32>
    %cst = arith.constant dense<0.000000e+00> : vector<128x128xf32>
    %7 = tpu.matmul %2, %3, %cst {dimension_numbers = #tpu.dot_dimension_numbers<[1], [0], [0], [1], [0, 0, 1, 1], [], []>} : vector<128x128xbf16>, vector<128x128xbf16>, vector<128x128xf32> -> vector<128x128xf32>
    %8 = vector.broadcast %4 : vector<1x128xf32> to vector<128x128xf32>
    %9 = arith.addf %7, %8 : vector<128x128xf32>
    %cst_13 = arith.constant 0.000000e+00 : f32
    %10 = vector.broadcast %cst_13 : f32 to vector<128x128xf32>
    %11 = arith.maximumf %9, %10 : vector<128x128xf32>
    %12 = arith.truncf %11 : vector<128x128xf32> to vector<128x128xbf16>
    %cst_14 = arith.constant dense<0.000000e+00> : vector<128x128xf32>
    %13 = tpu.matmul %12, %5, %cst_14 {dimension_numbers = #tpu.dot_dimension_numbers<[1], [0], [0], [1], [0, 0, 1, 1], [], []>} : vector<128x128xbf16>, vector<128x128xbf16>, vector<128x128xf32> -> vector<128x128xf32>
    %14 = vector.broadcast %6 : vector<1x128xf32> to vector<128x128xf32>
    %15 = arith.addf %13, %14 : vector<128x128xf32>
    %cst_15 = arith.constant 0.000000e+00 : f32
    %16 = vector.broadcast %cst_15 : f32 to vector<128x128xf32>
    %17 = arith.maximumf %15, %16 : vector<128x128xf32>
    %18 = arith.truncf %17 : vector<128x128xf32> to vector<128x128xbf16>
    %cst_16 = arith.constant dense<0.000000e+00> : vector<8x128xf32>
    %19 = tpu.matmul %1, %18, %cst_16 {dimension_numbers = #tpu.dot_dimension_numbers<[1], [0], [0], [1], [0, 0, 1, 1], [], []>} : vector<8x128xbf16>, vector<128x128xbf16>, vector<8x128xf32> -> vector<8x128xf32>
    %20 = arith.truncf %19 : vector<8x128xf32> to vector<8x128xbf16>
    %c0_17 = arith.constant 0 : index
    %c0_18 = arith.constant 0 : index
    %c0_19 = arith.constant 0 : index
    %21 = vector.load %arg12[%c0_17, %c0_18, %c0_19] : memref<4x128x128xbf16, #tpu.memory_space<vmem>>, vector<1x128x128xbf16>
    %22 = vector.shape_cast %21 : vector<1x128x128xbf16> to vector<128x128xbf16>
    %cst_20 = arith.constant dense<0.000000e+00> : vector<8x128xf32>
    %23 = tpu.matmul %20, %22, %cst_20 {dimension_numbers = #tpu.dot_dimension_numbers<[1], [0], [0], [1], [0, 0, 1, 1], [], []>} : vector<8x128xbf16>, vector<128x128xbf16>, vector<8x128xf32> -> vector<8x128xf32>
    %c0_21 = arith.constant 0 : index
    %c0_22 = arith.constant 0 : index
    %24 = vector.load %arg3[%c0_21, %c0_22] : memref<8x128xf32, #tpu.memory_space<vmem>>, vector<8x128xf32>
    %25 = arith.addf %23, %24 : vector<8x128xf32>
    %cst_23 = arith.constant dense<0.000000e+00> : vector<128x128xf32>
    %26 = tpu.matmul %0, %18, %cst_23 {dimension_numbers = #tpu.dot_dimension_numbers<[1], [0], [0], [1], [0, 0, 1, 1], [], []>} : vector<128x128xbf16>, vector<128x128xbf16>, vector<128x128xf32> -> vector<128x128xf32>
    %27 = arith.truncf %26 : vector<128x128xf32> to vector<128x128xbf16>
    %c0_24 = arith.constant 0 : index
    %c0_25 = arith.constant 0 : index
    %c0_26 = arith.constant 0 : index
    %28 = vector.load %arg8[%c0_24, %c0_25, %c0_26] : memref<3x128x128xbf16, #tpu.memory_space<vmem>>, vector<1x128x128xbf16>
    %29 = vector.shape_cast %28 : vector<1x128x128xbf16> to vector<128x128xbf16>
    %c0_27 = arith.constant 0 : index
    %c0_28 = arith.constant 0 : index
    %c0_29 = arith.constant 0 : index
    %30 = vector.load %arg9[%c0_27, %c0_28, %c0_29] : memref<3x1x128xf32, #tpu.memory_space<vmem>>, vector<1x1x128xf32>
    %31 = vector.shape_cast %30 : vector<1x1x128xf32> to vector<1x128xf32>
    %c0_30 = arith.constant 0 : index
    %c0_31 = arith.constant 0 : index
    %c0_32 = arith.constant 0 : index
    %32 = vector.load %arg10[%c0_30, %c0_31, %c0_32] : memref<3x128x128xbf16, #tpu.memory_space<vmem>>, vector<1x128x128xbf16>
    %33 = vector.shape_cast %32 : vector<1x128x128xbf16> to vector<128x128xbf16>
    %c0_33 = arith.constant 0 : index
    %c0_34 = arith.constant 0 : index
    %c0_35 = arith.constant 0 : index
    %34 = vector.load %arg11[%c0_33, %c0_34, %c0_35] : memref<3x1x128xf32, #tpu.memory_space<vmem>>, vector<1x1x128xf32>
    %35 = vector.shape_cast %34 : vector<1x1x128xf32> to vector<1x128xf32>
    %cst_36 = arith.constant dense<0.000000e+00> : vector<128x128xf32>
    %36 = tpu.matmul %27, %29, %cst_36 {dimension_numbers = #tpu.dot_dimension_numbers<[1], [0], [0], [1], [0, 0, 1, 1], [], []>} : vector<128x128xbf16>, vector<128x128xbf16>, vector<128x128xf32> -> vector<128x128xf32>
    %37 = vector.broadcast %31 : vector<1x128xf32> to vector<128x128xf32>
    %38 = arith.addf %36, %37 : vector<128x128xf32>
    %cst_37 = arith.constant 0.000000e+00 : f32
    %39 = vector.broadcast %cst_37 : f32 to vector<128x128xf32>
    %40 = arith.maximumf %38, %39 : vector<128x128xf32>
    %41 = arith.truncf %40 : vector<128x128xf32> to vector<128x128xbf16>
    %cst_38 = arith.constant dense<0.000000e+00> : vector<128x128xf32>
    %42 = tpu.matmul %41, %33, %cst_38 {dimension_numbers = #tpu.dot_dimension_numbers<[1], [0], [0], [1], [0, 0, 1, 1], [], []>} : vector<128x128xbf16>, vector<128x128xbf16>, vector<128x128xf32> -> vector<128x128xf32>
    %43 = vector.broadcast %35 : vector<1x128xf32> to vector<128x128xf32>
    %44 = arith.addf %42, %43 : vector<128x128xf32>
    %cst_39 = arith.constant 0.000000e+00 : f32
    %45 = vector.broadcast %cst_39 : f32 to vector<128x128xf32>
    %46 = arith.maximumf %44, %45 : vector<128x128xf32>
    %47 = arith.truncf %46 : vector<128x128xf32> to vector<128x128xbf16>
    %cst_40 = arith.constant dense<0.000000e+00> : vector<8x128xf32>
    %48 = tpu.matmul %1, %47, %cst_40 {dimension_numbers = #tpu.dot_dimension_numbers<[1], [0], [0], [1], [0, 0, 1, 1], [], []>} : vector<8x128xbf16>, vector<128x128xbf16>, vector<8x128xf32> -> vector<8x128xf32>
    %49 = arith.truncf %48 : vector<8x128xf32> to vector<8x128xbf16>
    %c1 = arith.constant 1 : index
    %c0_41 = arith.constant 0 : index
    %c0_42 = arith.constant 0 : index
    %50 = vector.load %arg12[%c1, %c0_41, %c0_42] : memref<4x128x128xbf16, #tpu.memory_space<vmem>>, vector<1x128x128xbf16>
    %51 = vector.shape_cast %50 : vector<1x128x128xbf16> to vector<128x128xbf16>
    %cst_43 = arith.constant dense<0.000000e+00> : vector<8x128xf32>
    %52 = tpu.matmul %49, %51, %cst_43 {dimension_numbers = #tpu.dot_dimension_numbers<[1], [0], [0], [1], [0, 0, 1, 1], [], []>} : vector<8x128xbf16>, vector<128x128xbf16>, vector<8x128xf32> -> vector<8x128xf32>
    %c1_44 = arith.constant 1 : index
    %c0_45 = arith.constant 0 : index
    %c0_46 = arith.constant 0 : index
    %53 = vector.load %arg13[%c1_44, %c0_45, %c0_46] : memref<4x1x128xf32, #tpu.memory_space<vmem>>, vector<1x1x128xf32>
    %54 = vector.shape_cast %53 : vector<1x1x128xf32> to vector<1x128xf32>
    %55 = vector.broadcast %54 : vector<1x128xf32> to vector<8x128xf32>
    %56 = arith.addf %52, %55 : vector<8x128xf32>
    %57 = arith.addf %25, %56 : vector<8x128xf32>
    %cst_47 = arith.constant dense<0.000000e+00> : vector<128x128xf32>
    %58 = tpu.matmul %0, %47, %cst_47 {dimension_numbers = #tpu.dot_dimension_numbers<[1], [0], [0], [1], [0, 0, 1, 1], [], []>} : vector<128x128xbf16>, vector<128x128xbf16>, vector<128x128xf32> -> vector<128x128xf32>
    %59 = arith.truncf %58 : vector<128x128xf32> to vector<128x128xbf16>
    %c1_48 = arith.constant 1 : index
    %c0_49 = arith.constant 0 : index
    %c0_50 = arith.constant 0 : index
    %60 = vector.load %arg8[%c1_48, %c0_49, %c0_50] : memref<3x128x128xbf16, #tpu.memory_space<vmem>>, vector<1x128x128xbf16>
    %61 = vector.shape_cast %60 : vector<1x128x128xbf16> to vector<128x128xbf16>
    %c1_51 = arith.constant 1 : index
    %c0_52 = arith.constant 0 : index
    %c0_53 = arith.constant 0 : index
    %62 = vector.load %arg9[%c1_51, %c0_52, %c0_53] : memref<3x1x128xf32, #tpu.memory_space<vmem>>, vector<1x1x128xf32>
    %63 = vector.shape_cast %62 : vector<1x1x128xf32> to vector<1x128xf32>
    %c1_54 = arith.constant 1 : index
    %c0_55 = arith.constant 0 : index
    %c0_56 = arith.constant 0 : index
    %64 = vector.load %arg10[%c1_54, %c0_55, %c0_56] : memref<3x128x128xbf16, #tpu.memory_space<vmem>>, vector<1x128x128xbf16>
    %65 = vector.shape_cast %64 : vector<1x128x128xbf16> to vector<128x128xbf16>
    %c1_57 = arith.constant 1 : index
    %c0_58 = arith.constant 0 : index
    %c0_59 = arith.constant 0 : index
    %66 = vector.load %arg11[%c1_57, %c0_58, %c0_59] : memref<3x1x128xf32, #tpu.memory_space<vmem>>, vector<1x1x128xf32>
    %67 = vector.shape_cast %66 : vector<1x1x128xf32> to vector<1x128xf32>
    %cst_60 = arith.constant dense<0.000000e+00> : vector<128x128xf32>
    %68 = tpu.matmul %59, %61, %cst_60 {dimension_numbers = #tpu.dot_dimension_numbers<[1], [0], [0], [1], [0, 0, 1, 1], [], []>} : vector<128x128xbf16>, vector<128x128xbf16>, vector<128x128xf32> -> vector<128x128xf32>
    %69 = vector.broadcast %63 : vector<1x128xf32> to vector<128x128xf32>
    %70 = arith.addf %68, %69 : vector<128x128xf32>
    %cst_61 = arith.constant 0.000000e+00 : f32
    %71 = vector.broadcast %cst_61 : f32 to vector<128x128xf32>
    %72 = arith.maximumf %70, %71 : vector<128x128xf32>
    %73 = arith.truncf %72 : vector<128x128xf32> to vector<128x128xbf16>
    %cst_62 = arith.constant dense<0.000000e+00> : vector<128x128xf32>
    %74 = tpu.matmul %73, %65, %cst_62 {dimension_numbers = #tpu.dot_dimension_numbers<[1], [0], [0], [1], [0, 0, 1, 1], [], []>} : vector<128x128xbf16>, vector<128x128xbf16>, vector<128x128xf32> -> vector<128x128xf32>
    %75 = vector.broadcast %67 : vector<1x128xf32> to vector<128x128xf32>
    %76 = arith.addf %74, %75 : vector<128x128xf32>
    %cst_63 = arith.constant 0.000000e+00 : f32
    %77 = vector.broadcast %cst_63 : f32 to vector<128x128xf32>
    %78 = arith.maximumf %76, %77 : vector<128x128xf32>
    %79 = arith.truncf %78 : vector<128x128xf32> to vector<128x128xbf16>
    %cst_64 = arith.constant dense<0.000000e+00> : vector<8x128xf32>
    %80 = tpu.matmul %1, %79, %cst_64 {dimension_numbers = #tpu.dot_dimension_numbers<[1], [0], [0], [1], [0, 0, 1, 1], [], []>} : vector<8x128xbf16>, vector<128x128xbf16>, vector<8x128xf32> -> vector<8x128xf32>
    %81 = arith.truncf %80 : vector<8x128xf32> to vector<8x128xbf16>
    %c2 = arith.constant 2 : index
    %c0_65 = arith.constant 0 : index
    %c0_66 = arith.constant 0 : index
    %82 = vector.load %arg12[%c2, %c0_65, %c0_66] : memref<4x128x128xbf16, #tpu.memory_space<vmem>>, vector<1x128x128xbf16>
    %83 = vector.shape_cast %82 : vector<1x128x128xbf16> to vector<128x128xbf16>
    %cst_67 = arith.constant dense<0.000000e+00> : vector<8x128xf32>
    %84 = tpu.matmul %81, %83, %cst_67 {dimension_numbers = #tpu.dot_dimension_numbers<[1], [0], [0], [1], [0, 0, 1, 1], [], []>} : vector<8x128xbf16>, vector<128x128xbf16>, vector<8x128xf32> -> vector<8x128xf32>
    %c2_68 = arith.constant 2 : index
    %c0_69 = arith.constant 0 : index
    %c0_70 = arith.constant 0 : index
    %85 = vector.load %arg13[%c2_68, %c0_69, %c0_70] : memref<4x1x128xf32, #tpu.memory_space<vmem>>, vector<1x1x128xf32>
    %86 = vector.shape_cast %85 : vector<1x1x128xf32> to vector<1x128xf32>
    %87 = vector.broadcast %86 : vector<1x128xf32> to vector<8x128xf32>
    %88 = arith.addf %84, %87 : vector<8x128xf32>
    %89 = arith.addf %57, %88 : vector<8x128xf32>
    %cst_71 = arith.constant dense<0.000000e+00> : vector<128x128xf32>
    %90 = tpu.matmul %0, %79, %cst_71 {dimension_numbers = #tpu.dot_dimension_numbers<[1], [0], [0], [1], [0, 0, 1, 1], [], []>} : vector<128x128xbf16>, vector<128x128xbf16>, vector<128x128xf32> -> vector<128x128xf32>
    %91 = arith.truncf %90 : vector<128x128xf32> to vector<128x128xbf16>
    %c2_72 = arith.constant 2 : index
    %c0_73 = arith.constant 0 : index
    %c0_74 = arith.constant 0 : index
    %92 = vector.load %arg8[%c2_72, %c0_73, %c0_74] : memref<3x128x128xbf16, #tpu.memory_space<vmem>>, vector<1x128x128xbf16>
    %93 = vector.shape_cast %92 : vector<1x128x128xbf16> to vector<128x128xbf16>
    %c2_75 = arith.constant 2 : index
    %c0_76 = arith.constant 0 : index
    %c0_77 = arith.constant 0 : index
    %94 = vector.load %arg9[%c2_75, %c0_76, %c0_77] : memref<3x1x128xf32, #tpu.memory_space<vmem>>, vector<1x1x128xf32>
    %95 = vector.shape_cast %94 : vector<1x1x128xf32> to vector<1x128xf32>
    %c2_78 = arith.constant 2 : index
    %c0_79 = arith.constant 0 : index
    %c0_80 = arith.constant 0 : index
    %96 = vector.load %arg10[%c2_78, %c0_79, %c0_80] : memref<3x128x128xbf16, #tpu.memory_space<vmem>>, vector<1x128x128xbf16>
    %97 = vector.shape_cast %96 : vector<1x128x128xbf16> to vector<128x128xbf16>
    %c2_81 = arith.constant 2 : index
    %c0_82 = arith.constant 0 : index
    %c0_83 = arith.constant 0 : index
    %98 = vector.load %arg11[%c2_81, %c0_82, %c0_83] : memref<3x1x128xf32, #tpu.memory_space<vmem>>, vector<1x1x128xf32>
    %99 = vector.shape_cast %98 : vector<1x1x128xf32> to vector<1x128xf32>
    %cst_84 = arith.constant dense<0.000000e+00> : vector<128x128xf32>
    %100 = tpu.matmul %91, %93, %cst_84 {dimension_numbers = #tpu.dot_dimension_numbers<[1], [0], [0], [1], [0, 0, 1, 1], [], []>} : vector<128x128xbf16>, vector<128x128xbf16>, vector<128x128xf32> -> vector<128x128xf32>
    %101 = vector.broadcast %95 : vector<1x128xf32> to vector<128x128xf32>
    %102 = arith.addf %100, %101 : vector<128x128xf32>
    %cst_85 = arith.constant 0.000000e+00 : f32
    %103 = vector.broadcast %cst_85 : f32 to vector<128x128xf32>
    %104 = arith.maximumf %102, %103 : vector<128x128xf32>
    %105 = arith.truncf %104 : vector<128x128xf32> to vector<128x128xbf16>
    %cst_86 = arith.constant dense<0.000000e+00> : vector<128x128xf32>
    %106 = tpu.matmul %105, %97, %cst_86 {dimension_numbers = #tpu.dot_dimension_numbers<[1], [0], [0], [1], [0, 0, 1, 1], [], []>} : vector<128x128xbf16>, vector<128x128xbf16>, vector<128x128xf32> -> vector<128x128xf32>
    %107 = vector.broadcast %99 : vector<1x128xf32> to vector<128x128xf32>
    %108 = arith.addf %106, %107 : vector<128x128xf32>
    %cst_87 = arith.constant 0.000000e+00 : f32
    %109 = vector.broadcast %cst_87 : f32 to vector<128x128xf32>
    %110 = arith.maximumf %108, %109 : vector<128x128xf32>
    %111 = arith.truncf %110 : vector<128x128xf32> to vector<128x128xbf16>
    %cst_88 = arith.constant dense<0.000000e+00> : vector<8x128xf32>
    %112 = tpu.matmul %1, %111, %cst_88 {dimension_numbers = #tpu.dot_dimension_numbers<[1], [0], [0], [1], [0, 0, 1, 1], [], []>} : vector<8x128xbf16>, vector<128x128xbf16>, vector<8x128xf32> -> vector<8x128xf32>
    %113 = arith.truncf %112 : vector<8x128xf32> to vector<8x128xbf16>
    %c3 = arith.constant 3 : index
    %c0_89 = arith.constant 0 : index
    %c0_90 = arith.constant 0 : index
    %114 = vector.load %arg12[%c3, %c0_89, %c0_90] : memref<4x128x128xbf16, #tpu.memory_space<vmem>>, vector<1x128x128xbf16>
    %115 = vector.shape_cast %114 : vector<1x128x128xbf16> to vector<128x128xbf16>
    %cst_91 = arith.constant dense<0.000000e+00> : vector<8x128xf32>
    %116 = tpu.matmul %113, %115, %cst_91 {dimension_numbers = #tpu.dot_dimension_numbers<[1], [0], [0], [1], [0, 0, 1, 1], [], []>} : vector<8x128xbf16>, vector<128x128xbf16>, vector<8x128xf32> -> vector<8x128xf32>
    %c3_92 = arith.constant 3 : index
    %c0_93 = arith.constant 0 : index
    %c0_94 = arith.constant 0 : index
    %117 = vector.load %arg13[%c3_92, %c0_93, %c0_94] : memref<4x1x128xf32, #tpu.memory_space<vmem>>, vector<1x1x128xf32>
    %118 = vector.shape_cast %117 : vector<1x1x128xf32> to vector<1x128xf32>
    %119 = vector.broadcast %118 : vector<1x128xf32> to vector<8x128xf32>
    %120 = arith.addf %116, %119 : vector<8x128xf32>
    %121 = arith.addf %89, %120 : vector<8x128xf32>
    %cst_95 = arith.constant 0.000000e+00 : f32
    %122 = vector.broadcast %cst_95 : f32 to vector<8x128xf32>
    %123 = arith.subf %122, %121 : vector<8x128xf32>
    %124 = math.exp %123 : vector<8x128xf32>
    %cst_96 = arith.constant 1.000000e+00 : f32
    %125 = vector.broadcast %cst_96 : f32 to vector<8x128xf32>
    %126 = arith.addf %125, %124 : vector<8x128xf32>
    %127 = tpu.reciprocal %126 {approx = true} : vector<8x128xf32> -> vector<8x128xf32>
    %c0_97 = arith.constant 0 : index
    %c0_98 = arith.constant 0 : index
    %128 = vector.load %arg14[%c0_97, %c0_98] : memref<8x128xf32, #tpu.memory_space<vmem>>, vector<8x128xf32>
    tpu.vector_store %arg14[%c0_97, %c0_98], %127 {strides = array<i32>} : memref<8x128xf32, #tpu.memory_space<vmem>>, vector<8x128xf32>,
    return
  }
}

</mosaic_0001>

<llo_original>
// kernel: gin_forward.1
$region0: #{gin_forward.1}
  #allocation0 [shape = 'u32[]', space=smem, size = 0x4, offset = 0x4, fixed_abs, tag = 'smem constant byte address 0x4 - core index']
  #allocation1 [shape = 'u32[144,128]{1,0:T(1,128)}', space=vmem, size = 0x12000, scoped, tag = 'internal scratch']
  %s0 = inlined_call_operand.vmem [shape: bf16[128,128], index: 0, kind: input, shape index: {}]
  %s1 = inlined_call_operand.vmem [shape: bf16[128,128], index: 1, kind: input, shape index: {}]
  %s2 = inlined_call_operand.vmem [shape: bf16[8,128], index: 2, kind: input, shape index: {}]
  %s3 = inlined_call_operand.vmem [shape: f32[8,128], index: 3, kind: input, shape index: {}]
  %s4 = inlined_call_operand.vmem [shape: bf16[128,128], index: 4, kind: input, shape index: {}]
  %s5 = inlined_call_operand.vmem [shape: f32[1,128], index: 5, kind: input, shape index: {}]
  %s6 = inlined_call_operand.vmem [shape: bf16[128,128], index: 6, kind: input, shape index: {}]
  %s7 = inlined_call_operand.vmem [shape: f32[1,128], index: 7, kind: input, shape index: {}]
  %s8 = inlined_call_operand.vmem [shape: bf16[3,128,128], index: 8, kind: input, shape index: {}]
  %s9 = inlined_call_operand.vmem [shape: f32[3,1,128], index: 9, kind: input, shape index: {}]
  %s10 = inlined_call_operand.vmem [shape: bf16[3,128,128], index: 10, kind: input, shape index: {}]
  %s11 = inlined_call_operand.vmem [shape: f32[3,1,128], index: 11, kind: input, shape index: {}]
  %s12 = inlined_call_operand.vmem [shape: bf16[4,128,128], index: 12, kind: input, shape index: {}]
  %s13 = inlined_call_operand.vmem [shape: f32[4,1,128], index: 13, kind: input, shape index: {}]
  %s14 = inlined_call_operand.vmem [shape: f32[8,128], index: 14, kind: output, shape index: {}]
  %s15 = sld [smem:[#allocation0]]
  $region66: #{gin_forward.1} parent=0
    _
  %s17 = ssub.s32 1, %s15
  %s18 = scalar_select 0, %s17, %s15
  // Predicated region
  $region2: #{gin_forward.1} parent=0 // pred_check
    _
  $region3: #{gin_forward.1} parent=0 // pred_check_branch
    %20 = sbr.rel (0) target = $region5
  $region4: #{gin_forward.1} parent=0 // pred_region
    _
  $region5: #{gin_forward.1} parent=0 // pred_fallthru
    _
  // Predicated region
  $region6: #{gin_forward.1} parent=0 // pred_check
    _
  $region7: #{gin_forward.1} parent=0 // pred_check_branch
    %22 = sbr.rel (0) target = $region9
  $region8: #{gin_forward.1} parent=0 // pred_region
    _
  $region9: #{gin_forward.1} parent=0 // pred_fallthru
    _
  // Predicated region
  $region10: #{gin_forward.1} parent=0 // pred_check
    _
  $region11: #{gin_forward.1} parent=0 // pred_check_branch
    %24 = sbr.rel (0) target = $region13
  $region12: #{gin_forward.1} parent=0 // pred_region
    _
  $region13: #{gin_forward.1} parent=0 // pred_fallthru
    _
  // Predicated region
  $region14: #{gin_forward.1} parent=0 // pred_check
    _
  $region15: #{gin_forward.1} parent=0 // pred_check_branch
    %26 = sbr.rel (0) target = $region17
  $region16: #{gin_forward.1} parent=0 // pred_region
    _
  $region17: #{gin_forward.1} parent=0 // pred_fallthru
    _
  // Predicated region
  $region18: #{gin_forward.1} parent=0 // pred_check
    _
  $region19: #{gin_forward.1} parent=0 // pred_check_branch
    %28 = sbr.rel (0) target = $region21
  $region20: #{gin_forward.1} parent=0 // pred_region
    _
  $region21: #{gin_forward.1} parent=0 // pred_fallthru
    _
  // Predicated region
  $region22: #{gin_forward.1} parent=0 // pred_check
    _
  $region23: #{gin_forward.1} parent=0 // pred_check_branch
    %30 = sbr.rel (0) target = $region25
  $region24: #{gin_forward.1} parent=0 // pred_region
    _
  $region25: #{gin_forward.1} parent=0 // pred_fallthru
    _
  // Predicated region
  $region26: #{gin_forward.1} parent=0 // pred_check
    _
  $region27: #{gin_forward.1} parent=0 // pred_check_branch
    %32 = sbr.rel (0) target = $region29
  $region28: #{gin_forward.1} parent=0 // pred_region
    _
  $region29: #{gin_forward.1} parent=0 // pred_fallthru
    _
  // Predicated region
  $region30: #{gin_forward.1} parent=0 // pred_check
    _
  $region31: #{gin_forward.1} parent=0 // pred_check_branch
    %34 = sbr.rel (0) target = $region33
  $region32: #{gin_forward.1} parent=0 // pred_region
    _
  $region33: #{gin_forward.1} parent=0 // pred_fallthru
    _
  // Predicated region
  $region34: #{gin_forward.1} parent=0 // pred_check
    _
  $region35: #{gin_forward.1} parent=0 // pred_check_branch
    %36 = sbr.rel (0) target = $region37
  $region36: #{gin_forward.1} parent=0 // pred_region
    _
  $region37: #{gin_forward.1} parent=0 // pred_fallthru
    _
  // Predicated region
  $region38: #{gin_forward.1} parent=0 // pred_check
    _
  $region39: #{gin_forward.1} parent=0 // pred_check_branch
    %38 = sbr.rel (0) target = $region41
  $region40: #{gin_forward.1} parent=0 // pred_region
    _
  $region41: #{gin_forward.1} parent=0 // pred_fallthru
    _
  // Predicated region
  $region42: #{gin_forward.1} parent=0 // pred_check
    _
  $region43: #{gin_forward.1} parent=0 // pred_check_branch
    %40 = sbr.rel (0) target = $region45
  $region44: #{gin_forward.1} parent=0 // pred_region
    _
  $region45: #{gin_forward.1} parent=0 // pred_fallthru
    _
  // Predicated region
  $region46: #{gin_forward.1} parent=0 // pred_check
    _
  $region47: #{gin_forward.1} parent=0 // pred_check_branch
    %42 = sbr.rel (0) target = $region49
  $region48: #{gin_forward.1} parent=0 // pred_region
    _
  $region49: #{gin_forward.1} parent=0 // pred_fallthru
    _
  // Predicated region
  $region50: #{gin_forward.1} parent=0 // pred_check
    _
  $region51: #{gin_forward.1} parent=0 // pred_check_branch
    %44 = sbr.rel (0) target = $region53
  $region52: #{gin_forward.1} parent=0 // pred_region
    _
  $region53: #{gin_forward.1} parent=0 // pred_fallthru
    _
  // Predicated region
  $region54: #{gin_forward.1} parent=0 // pred_check
    _
  $region55: #{gin_forward.1} parent=0 // pred_check_branch
    %46 = sbr.rel (0) target = $region57
  $region56: #{gin_forward.1} parent=0 // pred_region
    _
  $region57: #{gin_forward.1} parent=0 // pred_fallthru
    _
  %v48 = vld [vmem:[%s1] sm:$0xf]
  %v49 = vld [vmem:[%s1 + $0x4] sm:$0xf]
  %v50 = vld [vmem:[%s1 + $0x8] sm:$0xf]
  %v51 = vld [vmem:[%s1 + $0xc] sm:$0xf]
  %v52 = vld [vmem:[%s1 + $0x10] sm:$0xf]
  %v53 = vld [vmem:[%s1 + $0x14] sm:$0xf]
  %v54 = vld [vmem:[%s1 + $0x18] sm:$0xf]
  %v55 = vld [vmem:[%s1 + $0x1c] sm:$0xf]
  %v56 = vld [vmem:[%s1 + $0x20] sm:$0xf]
  %v57 = vld [vmem:[%s1 + $0x24] sm:$0xf]
  %v58 = vld [vmem:[%s1 + $0x28] sm:$0xf]
  %v59 = vld [vmem:[%s1 + $0x2c] sm:$0xf]
  %v60 = vld [vmem:[%s1 + $0x30] sm:$0xf]
  %v61 = vld [vmem:[%s1 + $0x34] sm:$0xf]
  %v62 = vld [vmem:[%s1 + $0x38] sm:$0xf]
  %v63 = vld [vmem:[%s1 + $0x3c] sm:$0xf]
  %v64 = vld [vmem:[%s2] sm:$0xf]
  %v65 = vld [vmem:[%s0] sm:$0xf]
  %v66 = vld [vmem:[%s0 + $0x4] sm:$0xf]
  %v67 = vld [vmem:[%s0 + $0x8] sm:$0xf]
  %v68 = vld [vmem:[%s0 + $0xc] sm:$0xf]
  %v69 = vld [vmem:[%s0 + $0x10] sm:$0xf]
  %v70 = vld [vmem:[%s0 + $0x14] sm:$0xf]
  %v71 = vld [vmem:[%s0 + $0x18] sm:$0xf]
  %v72 = vld [vmem:[%s0 + $0x1c] sm:$0xf]
  %v73 = vld [vmem:[%s0 + $0x20] sm:$0xf]
  %v74 = vld [vmem:[%s0 + $0x24] sm:$0xf]
  %v75 = vld [vmem:[%s0 + $0x28] sm:$0xf]
  %v76 = vld [vmem:[%s0 + $0x2c] sm:$0xf]
  %v77 = vld [vmem:[%s0 + $0x30] sm:$0xf]
  %v78 = vld [vmem:[%s0 + $0x34] sm:$0xf]
  %v79 = vld [vmem:[%s0 + $0x38] sm:$0xf]
  %v80 = vld [vmem:[%s0 + $0x3c] sm:$0xf]
  %v81 = vld [vmem:[%s4] sm:$0xf]
  %v82 = vld [vmem:[%s4 + $0x4] sm:$0xf]
  %v83 = vld [vmem:[%s4 + $0x8] sm:$0xf]
  %v84 = vld [vmem:[%s4 + $0xc] sm:$0xf]
  %v85 = vld [vmem:[%s4 + $0x10] sm:$0xf]
  %v86 = vld [vmem:[%s4 + $0x14] sm:$0xf]
  %v87 = vld [vmem:[%s4 + $0x18] sm:$0xf]
  %v88 = vld [vmem:[%s4 + $0x1c] sm:$0xf]
  %v89 = vld [vmem:[%s4 + $0x20] sm:$0xf]
  %v90 = vld [vmem:[%s4 + $0x24] sm:$0xf]
  %v91 = vld [vmem:[%s4 + $0x28] sm:$0xf]
  %v92 = vld [vmem:[%s4 + $0x2c] sm:$0xf]
  %v93 = vld [vmem:[%s4 + $0x30] sm:$0xf]
  %v94 = vld [vmem:[%s4 + $0x34] sm:$0xf]
  %v95 = vld [vmem:[%s4 + $0x38] sm:$0xf]
  %v96 = vld [vmem:[%s4 + $0x3c] sm:$0xf]
  %v97 = vld [vmem:[%s5] sm:$0x1]
  %v98 = vld [vmem:[%s6] sm:$0xf]
  %v99 = vld [vmem:[%s6 + $0x4] sm:$0xf]
  %v100 = vld [vmem:[%s6 + $0x8] sm:$0xf]
  %v101 = vld [vmem:[%s6 + $0xc] sm:$0xf]
  %v102 = vld [vmem:[%s6 + $0x10] sm:$0xf]
  %v103 = vld [vmem:[%s6 + $0x14] sm:$0xf]
  %v104 = vld [vmem:[%s6 + $0x18] sm:$0xf]
  %v105 = vld [vmem:[%s6 + $0x1c] sm:$0xf]
  %v106 = vld [vmem:[%s6 + $0x20] sm:$0xf]
  %v107 = vld [vmem:[%s6 + $0x24] sm:$0xf]
  %v108 = vld [vmem:[%s6 + $0x28] sm:$0xf]
  %v109 = vld [vmem:[%s6 + $0x2c] sm:$0xf]
  %v110 = vld [vmem:[%s6 + $0x30] sm:$0xf]
  %v111 = vld [vmem:[%s6 + $0x34] sm:$0xf]
  %v112 = vld [vmem:[%s6 + $0x38] sm:$0xf]
  %v113 = vld [vmem:[%s6 + $0x3c] sm:$0xf]
  %v114 = vld [vmem:[%s7] sm:$0x1]
  %v116 = vlaneseq
  %v117 = vshrl.u32 %v116, 7
  %v118 = vsub.s32 0, %v117
  %v119 = vrot.slane %v97, %v118
  %v137 = vunpack.c.l.b16 %v65
  %v138 = vunpack.c.l.b16 %v66
  %v139 = vunpack.c.l.b16 %v67
  %v140 = vunpack.c.l.b16 %v68
  %v141 = vunpack.c.l.b16 %v69
  %v142 = vunpack.c.l.b16 %v70
  %v143 = vunpack.c.l.b16 %v71
  %v144 = vunpack.c.l.b16 %v72
  %v145 = vunpack.c.l.b16 %v73
  %v146 = vunpack.c.l.b16 %v74
  %v147 = vunpack.c.l.b16 %v75
  %v148 = vunpack.c.l.b16 %v76
  %v149 = vunpack.c.l.b16 %v77
  %v150 = vunpack.c.l.b16 %v78
  %v151 = vunpack.c.l.b16 %v79
  %v152 = vunpack.c.l.b16 %v80
  %v153 = vpack.c.b16 %v138, %v137
  %v154 = vpack.c.b16 %v140, %v139
  %v155 = vpack.c.b16 %v142, %v141
  %v156 = vpack.c.b16 %v144, %v143
  %v157 = vpack.c.b16 %v146, %v145
  %v158 = vpack.c.b16 %v148, %v147
  %v159 = vpack.c.b16 %v150, %v149
  %v160 = vpack.c.b16 %v152, %v151
  %v185 = vunpack.c.l.b16 %v81
  %v186 = vunpack.c.l.b16 %v82
  %v187 = vunpack.c.l.b16 %v83
  %v188 = vunpack.c.l.b16 %v84
  %v189 = vunpack.c.l.b16 %v85
  %v190 = vunpack.c.l.b16 %v86
  %v191 = vunpack.c.l.b16 %v87
  %v192 = vunpack.c.l.b16 %v88
  %v193 = vunpack.c.l.b16 %v89
  %v194 = vunpack.c.l.b16 %v90
  %v195 = vunpack.c.l.b16 %v91
  %v196 = vunpack.c.l.b16 %v92
  %v197 = vunpack.c.l.b16 %v93
  %v198 = vunpack.c.l.b16 %v94
  %v199 = vunpack.c.l.b16 %v95
  %v200 = vunpack.c.l.b16 %v96
  %v201 = vpack.c.b16 %v186, %v185
  %v202 = vpack.c.b16 %v188, %v187
  %v203 = vpack.c.b16 %v190, %v189
  %v204 = vpack.c.b16 %v192, %v191
  %v205 = vpack.c.b16 %v194, %v193
  %v206 = vpack.c.b16 %v196, %v195
  %v207 = vpack.c.b16 %v198, %v197
  %v208 = vpack.c.b16 %v200, %v199
  %217 = vmatprep.subr.bf16.mxu0 0
  %218 = vmatpush1.bf16.msra.mxu0 %v208
  %219 = vmatprep.subr.bf16.mxu0 0
  %220 = vmatpush1.bf16.msra.mxu0 %v207
  %221 = vmatprep.subr.bf16.mxu0 0
  %222 = vmatpush1.bf16.msra.mxu0 %v206
  %223 = vmatprep.subr.bf16.mxu0 0
  %224 = vmatpush1.bf16.msra.mxu0 %v205
  %225 = vmatprep.subr.bf16.mxu0 0
  %226 = vmatpush1.bf16.msra.mxu0 %v204
  %227 = vmatprep.subr.bf16.mxu0 0
  %228 = vmatpush1.bf16.msra.mxu0 %v203
  %229 = vmatprep.subr.bf16.mxu0 0
  %230 = vmatpush1.bf16.msra.mxu0 %v202
  %231 = vmatprep.subr.bf16.mxu0 0
  %232 = vmatpush1.bf16.msra.mxu0 %v201
  %233 = vmatprep.subr.bf16.mxu0 0
  %234 = vmatpush2.bf16.msra.mxu0 0
  %235 = vmatprep.subr.bf16.mxu0 0
  %236 = vmatpush2.bf16.msra.mxu0 0
  %237 = vmatprep.subr.bf16.mxu0 0
  %238 = vmatpush2.bf16.msra.mxu0 0
  %239 = vmatprep.subr.bf16.mxu0 0
  %240 = vmatpush2.bf16.msra.mxu0 0
  %241 = vmatprep.subr.bf16.mxu0 0
  %242 = vmatpush2.bf16.msra.mxu0 0
  %243 = vmatprep.subr.bf16.mxu0 0
  %244 = vmatpush2.bf16.msra.mxu0 0
  %245 = vmatprep.subr.bf16.mxu0 0
  %246 = vmatpush2.bf16.msra.mxu0 0
  %247 = vmatprep.subr.bf16.mxu0 0
  %248 = vmatpush2.bf16.msra.mxu0 0
  %249 = vmatprep.mubr.bf16.mxu0 0
  %250 = vmatmul.mubr.bf16.gmra.mxu0 %v153
  %v251 = vpop.f32.mrf.mxu0
  %v252 = vadd.f32 %v119, %v251
  %v253 = vpop.f32.mrf.mxu0
  %v254 = vpop.f32.mrf.mxu0
  %v255 = vadd.f32 %v119, %v254
  %v256 = vpop.f32.mrf.mxu0
  %257 = vmatprep.mubr.bf16.mxu0 0
  %258 = vmatmul.mubr.bf16.gmra.mxu0 %v154
  %v259 = vpop.f32.mrf.mxu0
  %v260 = vadd.f32 %v119, %v259
  %v261 = vpop.f32.mrf.mxu0
  %v262 = vpop.f32.mrf.mxu0
  %v263 = vadd.f32 %v119, %v262
  %v264 = vpop.f32.mrf.mxu0
  %265 = vmatprep.mubr.bf16.mxu0 0
  %266 = vmatmul.mubr.bf16.gmra.mxu0 %v155
  %v267 = vpop.f32.mrf.mxu0
  %v268 = vadd.f32 %v119, %v267
  %v269 = vpop.f32.mrf.mxu0
  %v270 = vpop.f32.mrf.mxu0
  %v271 = vadd.f32 %v119, %v270
  %v272 = vpop.f32.mrf.mxu0
  %273 = vmatprep.mubr.bf16.mxu0 0
  %274 = vmatmul.mubr.bf16.gmra.mxu0 %v156
  %v275 = vpop.f32.mrf.mxu0
  %v276 = vadd.f32 %v119, %v275
  %v277 = vpop.f32.mrf.mxu0
  %v278 = vpop.f32.mrf.mxu0
  %v279 = vadd.f32 %v119, %v278
  %v280 = vpop.f32.mrf.mxu0
  %281 = vmatprep.mubr.bf16.mxu0 0
  %282 = vmatmul.mubr.bf16.gmra.mxu0 %v157
  %v283 = vpop.f32.mrf.mxu0
  %v284 = vadd.f32 %v119, %v283
  %v285 = vpop.f32.mrf.mxu0
  %v286 = vpop.f32.mrf.mxu0
  %v287 = vadd.f32 %v119, %v286
  %v288 = vpop.f32.mrf.mxu0
  %289 = vmatprep.mubr.bf16.mxu0 0
  %290 = vmatmul.mubr.bf16.gmra.mxu0 %v158
  %v291 = vpop.f32.mrf.mxu0
  %v292 = vadd.f32 %v119, %v291
  %v293 = vpop.f32.mrf.mxu0
  %v294 = vpop.f32.mrf.mxu0
  %v295 = vadd.f32 %v119, %v294
  %v296 = vpop.f32.mrf.mxu0
  %297 = vmatprep.mubr.bf16.mxu0 0
  %298 = vmatmul.mubr.bf16.gmra.mxu0 %v159
  %v299 = vpop.f32.mrf.mxu0
  %v300 = vadd.f32 %v119, %v299
  %v301 = vpop.f32.mrf.mxu0
  %v302 = vpop.f32.mrf.mxu0
  %v303 = vadd.f32 %v119, %v302
  %v304 = vpop.f32.mrf.mxu0
  %305 = vmatprep.mubr.bf16.mxu0 0
  %306 = vmatmul.mubr.bf16.gmra.mxu0 %v160
  %v307 = vpop.f32.mrf.mxu0
  %v308 = vadd.f32 %v119, %v307
  %v309 = vpop.f32.mrf.mxu0
  %v310 = vpop.f32.mrf.mxu0
  %v311 = vadd.f32 %v119, %v310
  %v312 = vpop.f32.mrf.mxu0
  %313 = vdwg.mxu0
  %v314 = vmax.f32 %v252, 0.0
  %v315 = vmax.f32 %v255, 0.0
  %v316 = vmax.f32 %v260, 0.0
  %v317 = vmax.f32 %v263, 0.0
  %v318 = vmax.f32 %v268, 0.0
  %v319 = vmax.f32 %v271, 0.0
  %v320 = vmax.f32 %v276, 0.0
  %v321 = vmax.f32 %v279, 0.0
  %v322 = vmax.f32 %v284, 0.0
  %v323 = vmax.f32 %v287, 0.0
  %v324 = vmax.f32 %v292, 0.0
  %v325 = vmax.f32 %v295, 0.0
  %v326 = vmax.f32 %v300, 0.0
  %v327 = vmax.f32 %v303, 0.0
  %v328 = vmax.f32 %v308, 0.0
  %v329 = vmax.f32 %v311, 0.0
  %v330 = vpack.c.bf16 %v315, %v314
  %v331 = vpack.c.bf16 %v317, %v316
  %v332 = vpack.c.bf16 %v319, %v318
  %v333 = vpack.c.bf16 %v321, %v320
  %v334 = vpack.c.bf16 %v323, %v322
  %v335 = vpack.c.bf16 %v325, %v324
  %v336 = vpack.c.bf16 %v327, %v326
  %v337 = vpack.c.bf16 %v329, %v328
  %v339 = vlaneseq
  %v340 = vshrl.u32 %v339, 7
  %v341 = vsub.s32 0, %v340
  %v342 = vrot.slane %v114, %v341
  %v360 = vunpack.c.l.b16 %v98
  %v361 = vunpack.c.l.b16 %v99
  %v362 = vunpack.c.l.b16 %v100
  %v363 = vunpack.c.l.b16 %v101
  %v364 = vunpack.c.l.b16 %v102
  %v365 = vunpack.c.l.b16 %v103
  %v366 = vunpack.c.l.b16 %v104
  %v367 = vunpack.c.l.b16 %v105
  %v368 = vunpack.c.l.b16 %v106
  %v369 = vunpack.c.l.b16 %v107
  %v370 = vunpack.c.l.b16 %v108
  %v371 = vunpack.c.l.b16 %v109
  %v372 = vunpack.c.l.b16 %v110
  %v373 = vunpack.c.l.b16 %v111
  %v374 = vunpack.c.l.b16 %v112
  %v375 = vunpack.c.l.b16 %v113
  %v376 = vpack.c.b16 %v361, %v360
  %v377 = vpack.c.b16 %v363, %v362
  %v378 = vpack.c.b16 %v365, %v364
  %v379 = vpack.c.b16 %v367, %v366
  %v380 = vpack.c.b16 %v369, %v368
  %v381 = vpack.c.b16 %v371, %v370
  %v382 = vpack.c.b16 %v373, %v372
  %v383 = vpack.c.b16 %v375, %v374
  %392 = vmatprep.subr.bf16.mxu0 0
  %393 = vmatpush1.bf16.msra.mxu0 %v383
  %394 = vmatprep.subr.bf16.mxu0 0
  %395 = vmatpush1.bf16.msra.mxu0 %v382
  %396 = vmatprep.subr.bf16.mxu0 0
  %397 = vmatpush1.bf16.msra.mxu0 %v381
  %398 = vmatprep.subr.bf16.mxu0 0
  %399 = vmatpush1.bf16.msra.mxu0 %v380
  %400 = vmatprep.subr.bf16.mxu0 0
  %401 = vmatpush1.bf16.msra.mxu0 %v379
  %402 = vmatprep.subr.bf16.mxu0 0
  %403 = vmatpush1.bf16.msra.mxu0 %v378
  %404 = vmatprep.subr.bf16.mxu0 0
  %405 = vmatpush1.bf16.msra.mxu0 %v377
  %406 = vmatprep.subr.bf16.mxu0 0
  %407 = vmatpush1.bf16.msra.mxu0 %v376
  %408 = vmatprep.subr.bf16.mxu0 0
  %409 = vmatpush2.bf16.msra.mxu0 0
  %410 = vmatprep.subr.bf16.mxu0 0
  %411 = vmatpush2.bf16.msra.mxu0 0
  %412 = vmatprep.subr.bf16.mxu0 0
  %413 = vmatpush2.bf16.msra.mxu0 0
  %414 = vmatprep.subr.bf16.mxu0 0
  %415 = vmatpush2.bf16.msra.mxu0 0
  %416 = vmatprep.subr.bf16.mxu0 0
  %417 = vmatpush2.bf16.msra.mxu0 0
  %418 = vmatprep.subr.bf16.mxu0 0
  %419 = vmatpush2.bf16.msra.mxu0 0
  %420 = vmatprep.subr.bf16.mxu0 0
  %421 = vmatpush2.bf16.msra.mxu0 0
  %422 = vmatprep.subr.bf16.mxu0 0
  %423 = vmatpush2.bf16.msra.mxu0 0
  %424 = vmatprep.mubr.bf16.mxu0 0
  %425 = vmatmul.mubr.bf16.gmra.mxu0 %v330
  %v426 = vpop.f32.mrf.mxu0
  %v427 = vadd.f32 %v342, %v426
  %v428 = vpop.f32.mrf.mxu0
  %v429 = vpop.f32.mrf.mxu0
  %v430 = vadd.f32 %v342, %v429
  %v431 = vpop.f32.mrf.mxu0
  %432 = vmatprep.mubr.bf16.mxu0 0
  %433 = vmatmul.mubr.bf16.gmra.mxu0 %v331
  %v434 = vpop.f32.mrf.mxu0
  %v435 = vadd.f32 %v342, %v434
  %v436 = vpop.f32.mrf.mxu0
  %v437 = vpop.f32.mrf.mxu0
  %v438 = vadd.f32 %v342, %v437
  %v439 = vpop.f32.mrf.mxu0
  %440 = vmatprep.mubr.bf16.mxu0 0
  %441 = vmatmul.mubr.bf16.gmra.mxu0 %v332
  %v442 = vpop.f32.mrf.mxu0
  %v443 = vadd.f32 %v342, %v442
  %v444 = vpop.f32.mrf.mxu0
  %v445 = vpop.f32.mrf.mxu0
  %v446 = vadd.f32 %v342, %v445
  %v447 = vpop.f32.mrf.mxu0
  %448 = vmatprep.mubr.bf16.mxu0 0
  %449 = vmatmul.mubr.bf16.gmra.mxu0 %v333
  %v450 = vpop.f32.mrf.mxu0
  %v451 = vadd.f32 %v342, %v450
  %v452 = vpop.f32.mrf.mxu0
  %v453 = vpop.f32.mrf.mxu0
  %v454 = vadd.f32 %v342, %v453
  %v455 = vpop.f32.mrf.mxu0
  %456 = vmatprep.mubr.bf16.mxu0 0
  %457 = vmatmul.mubr.bf16.gmra.mxu0 %v334
  %v458 = vpop.f32.mrf.mxu0
  %v459 = vadd.f32 %v342, %v458
  %v460 = vpop.f32.mrf.mxu0
  %v461 = vpop.f32.mrf.mxu0
  %v462 = vadd.f32 %v342, %v461
  %v463 = vpop.f32.mrf.mxu0
  %464 = vmatprep.mubr.bf16.mxu0 0
  %465 = vmatmul.mubr.bf16.gmra.mxu0 %v335
  %v466 = vpop.f32.mrf.mxu0
  %v467 = vadd.f32 %v342, %v466
  %v468 = vpop.f32.mrf.mxu0
  %v469 = vpop.f32.mrf.mxu0
  %v470 = vadd.f32 %v342, %v469
  %v471 = vpop.f32.mrf.mxu0
  %472 = vmatprep.mubr.bf16.mxu0 0
  %473 = vmatmul.mubr.bf16.gmra.mxu0 %v336
  %v474 = vpop.f32.mrf.mxu0
  %v475 = vadd.f32 %v342, %v474
  %v476 = vpop.f32.mrf.mxu0
  %v477 = vpop.f32.mrf.mxu0
  %v478 = vadd.f32 %v342, %v477
  %v479 = vpop.f32.mrf.mxu0
  %480 = vmatprep.mubr.bf16.mxu0 0
  %481 = vmatmul.mubr.bf16.gmra.mxu0 %v337
  %v482 = vpop.f32.mrf.mxu0
  %v483 = vadd.f32 %v342, %v482
  %v484 = vpop.f32.mrf.mxu0
  %v485 = vpop.f32.mrf.mxu0
  %v486 = vadd.f32 %v342, %v485
  %v487 = vpop.f32.mrf.mxu0
  %488 = vdwg.mxu0
  %v489 = vmax.f32 %v427, 0.0
  %v490 = vmax.f32 %v430, 0.0
  %v491 = vmax.f32 %v435, 0.0
  %v492 = vmax.f32 %v438, 0.0
  %v493 = vmax.f32 %v443, 0.0
  %v494 = vmax.f32 %v446, 0.0
  %v495 = vmax.f32 %v451, 0.0
  %v496 = vmax.f32 %v454, 0.0
  %v497 = vmax.f32 %v459, 0.0
  %v498 = vmax.f32 %v462, 0.0
  %v499 = vmax.f32 %v467, 0.0
  %v500 = vmax.f32 %v470, 0.0
  %v501 = vmax.f32 %v475, 0.0
  %v502 = vmax.f32 %v478, 0.0
  %v503 = vmax.f32 %v483, 0.0
  %v504 = vmax.f32 %v486, 0.0
  %v505 = vpack.c.bf16 %v490, %v489
  %v506 = vpack.c.bf16 %v492, %v491
  %v507 = vpack.c.bf16 %v494, %v493
  %v508 = vpack.c.bf16 %v496, %v495
  %v509 = vpack.c.bf16 %v498, %v497
  %v510 = vpack.c.bf16 %v500, %v499
  %v511 = vpack.c.bf16 %v502, %v501
  %v512 = vpack.c.bf16 %v504, %v503
  %513 = vmatprep.subr.bf16.mxu0 0
  %514 = vmatpush1.bf16.msra.mxu0 %v512
  %515 = vmatprep.subr.bf16.mxu0 0
  %516 = vmatpush1.bf16.msra.mxu0 %v511
  %517 = vmatprep.subr.bf16.mxu0 0
  %518 = vmatpush1.bf16.msra.mxu0 %v510
  %519 = vmatprep.subr.bf16.mxu0 0
  %520 = vmatpush1.bf16.msra.mxu0 %v509
  %521 = vmatprep.subr.bf16.mxu0 0
  %522 = vmatpush1.bf16.msra.mxu0 %v508
  %523 = vmatprep.subr.bf16.mxu0 0
  %524 = vmatpush1.bf16.msra.mxu0 %v507
  %525 = vmatprep.subr.bf16.mxu0 0
  %526 = vmatpush1.bf16.msra.mxu0 %v506
  %527 = vmatprep.subr.bf16.mxu0 0
  %528 = vmatpush1.bf16.msra.mxu0 %v505
  %529 = vmatprep.subr.bf16.mxu0 0
  %530 = vmatpush2.bf16.msra.mxu0 0
  %531 = vmatprep.subr.bf16.mxu0 0
  %532 = vmatpush2.bf16.msra.mxu0 0
  %533 = vmatprep.subr.bf16.mxu0 0
  %534 = vmatpush2.bf16.msra.mxu0 0
  %535 = vmatprep.subr.bf16.mxu0 0
  %536 = vmatpush2.bf16.msra.mxu0 0
  %537 = vmatprep.subr.bf16.mxu0 0
  %538 = vmatpush2.bf16.msra.mxu0 0
  %539 = vmatprep.subr.bf16.mxu0 0
  %540 = vmatpush2.bf16.msra.mxu0 0
  %541 = vmatprep.subr.bf16.mxu0 0
  %542 = vmatpush2.bf16.msra.mxu0 0
  %543 = vmatprep.subr.bf16.mxu0 0
  %544 = vmatpush2.bf16.msra.mxu0 0
  %545 = vmatprep.mubr.bf16.mxu0 0
  %546 = vmatmul.mubr.bf16.gmra.mxu0 %v64
  %v547 = vpop.f32.mrf.mxu0
  %v548 = vadd.f32 0.0, %v547
  %v549 = vpop.f32.mrf.mxu0
  %v550 = vpop.f32.mrf.mxu0
  %v551 = vpop.f32.mrf.mxu0
  %552 = vdwg.mxu0
  %v553 = vpack.c.bf16 %v548, %v548
  %v554 = vld [vmem:[%s12] sm:$0xf]
  %v555 = vld [vmem:[%s12 + $0x4] sm:$0xf]
  %v556 = vld [vmem:[%s12 + $0x8] sm:$0xf]
  %v557 = vld [vmem:[%s12 + $0xc] sm:$0xf]
  %v558 = vld [vmem:[%s12 + $0x10] sm:$0xf]
  %v559 = vld [vmem:[%s12 + $0x14] sm:$0xf]
  %v560 = vld [vmem:[%s12 + $0x18] sm:$0xf]
  %v561 = vld [vmem:[%s12 + $0x1c] sm:$0xf]
  %v562 = vld [vmem:[%s12 + $0x20] sm:$0xf]
  %v563 = vld [vmem:[%s12 + $0x24] sm:$0xf]
  %v564 = vld [vmem:[%s12 + $0x28] sm:$0xf]
  %v565 = vld [vmem:[%s12 + $0x2c] sm:$0xf]
  %v566 = vld [vmem:[%s12 + $0x30] sm:$0xf]
  %v567 = vld [vmem:[%s12 + $0x34] sm:$0xf]
  %v568 = vld [vmem:[%s12 + $0x38] sm:$0xf]
  %v569 = vld [vmem:[%s12 + $0x3c] sm:$0xf]
  %v570 = vld [vmem:[%s3] sm:$0xff]
  %v587 = vunpack.c.l.b16 %v554
  %v588 = vunpack.c.l.b16 %v555
  %v589 = vunpack.c.l.b16 %v556
  %v590 = vunpack.c.l.b16 %v557
  %v591 = vunpack.c.l.b16 %v558
  %v592 = vunpack.c.l.b16 %v559
  %v593 = vunpack.c.l.b16 %v560
  %v594 = vunpack.c.l.b16 %v561
  %v595 = vunpack.c.l.b16 %v562
  %v596 = vunpack.c.l.b16 %v563
  %v597 = vunpack.c.l.b16 %v564
  %v598 = vunpack.c.l.b16 %v565
  %v599 = vunpack.c.l.b16 %v566
  %v600 = vunpack.c.l.b16 %v567
  %v601 = vunpack.c.l.b16 %v568
  %v602 = vunpack.c.l.b16 %v569
  %v603 = vpack.c.b16 %v588, %v587
  %v604 = vpack.c.b16 %v590, %v589
  %v605 = vpack.c.b16 %v592, %v591
  %v606 = vpack.c.b16 %v594, %v593
  %v607 = vpack.c.b16 %v596, %v595
  %v608 = vpack.c.b16 %v598, %v597
  %v609 = vpack.c.b16 %v600, %v599
  %v610 = vpack.c.b16 %v602, %v601
  %619 = vmatprep.subr.bf16.mxu0 0
  %620 = vmatpush1.bf16.msra.mxu0 %v610
  %621 = vmatprep.subr.bf16.mxu0 0
  %622 = vmatpush1.bf16.msra.mxu0 %v609
  %623 = vmatprep.subr.bf16.mxu0 0
  %624 = vmatpush1.bf16.msra.mxu0 %v608
  %625 = vmatprep.subr.bf16.mxu0 0
  %626 = vmatpush1.bf16.msra.mxu0 %v607
  %627 = vmatprep.subr.bf16.mxu0 0
  %628 = vmatpush1.bf16.msra.mxu0 %v606
  %629 = vmatprep.subr.bf16.mxu0 0
  %630 = vmatpush1.bf16.msra.mxu0 %v605
  %631 = vmatprep.subr.bf16.mxu0 0
  %632 = vmatpush1.bf16.msra.mxu0 %v604
  %633 = vmatprep.subr.bf16.mxu0 0
  %634 = vmatpush1.bf16.msra.mxu0 %v603
  %635 = vmatprep.subr.bf16.mxu0 0
  %636 = vmatpush2.bf16.msra.mxu0 0
  %637 = vmatprep.subr.bf16.mxu0 0
  %638 = vmatpush2.bf16.msra.mxu0 0
  %639 = vmatprep.subr.bf16.mxu0 0
  %640 = vmatpush2.bf16.msra.mxu0 0
  %641 = vmatprep.subr.bf16.mxu0 0
  %642 = vmatpush2.bf16.msra.mxu0 0
  %643 = vmatprep.subr.bf16.mxu0 0
  %644 = vmatpush2.bf16.msra.mxu0 0
  %645 = vmatprep.subr.bf16.mxu0 0
  %646 = vmatpush2.bf16.msra.mxu0 0
  %647 = vmatprep.subr.bf16.mxu0 0
  %648 = vmatpush2.bf16.msra.mxu0 0
  %649 = vmatprep.subr.bf16.mxu0 0
  %650 = vmatpush2.bf16.msra.mxu0 0
  %651 = vmatprep.mubr.bf16.mxu0 0
  %652 = vmatmul.mubr.bf16.gmra.mxu0 %v553
  %v653 = vpop.f32.mrf.mxu0
  %v654 = vadd.f32 %v570, %v653
  %v655 = vpop.f32.mrf.mxu0
  %v656 = vpop.f32.mrf.mxu0
  %v657 = vpop.f32.mrf.mxu0
  %658 = vdwg.mxu0
  %v675 = vunpack.c.l.b16 %v48
  %v676 = vunpack.c.l.b16 %v49
  %v677 = vunpack.c.l.b16 %v50
  %v678 = vunpack.c.l.b16 %v51
  %v679 = vunpack.c.l.b16 %v52
  %v680 = vunpack.c.l.b16 %v53
  %v681 = vunpack.c.l.b16 %v54
  %v682 = vunpack.c.l.b16 %v55
  %v683 = vunpack.c.l.b16 %v56
  %v684 = vunpack.c.l.b16 %v57
  %v685 = vunpack.c.l.b16 %v58
  %v686 = vunpack.c.l.b16 %v59
  %v687 = vunpack.c.l.b16 %v60
  %v688 = vunpack.c.l.b16 %v61
  %v689 = vunpack.c.l.b16 %v62
  %v690 = vunpack.c.l.b16 %v63
  %v691 = vpack.c.b16 %v676, %v675
  %v692 = vpack.c.b16 %v678, %v677
  %v693 = vpack.c.b16 %v680, %v679
  %v694 = vpack.c.b16 %v682, %v681
  %v695 = vpack.c.b16 %v684, %v683
  %v696 = vpack.c.b16 %v686, %v685
  %v697 = vpack.c.b16 %v688, %v687
  %v698 = vpack.c.b16 %v690, %v689
  %707 = vmatprep.subr.bf16.mxu0 0
  %708 = vmatpush1.bf16.msra.mxu0 %v512
  %709 = vmatprep.subr.bf16.mxu0 0
  %710 = vmatpush1.bf16.msra.mxu0 %v511
  %711 = vmatprep.subr.bf16.mxu0 0
  %712 = vmatpush1.bf16.msra.mxu0 %v510
  %713 = vmatprep.subr.bf16.mxu0 0
  %714 = vmatpush1.bf16.msra.mxu0 %v509
  %715 = vmatprep.subr.bf16.mxu0 0
  %716 = vmatpush1.bf16.msra.mxu0 %v508
  %717 = vmatprep.subr.bf16.mxu0 0
  %718 = vmatpush1.bf16.msra.mxu0 %v507
  %719 = vmatprep.subr.bf16.mxu0 0
  %720 = vmatpush1.bf16.msra.mxu0 %v506
  %721 = vmatprep.subr.bf16.mxu0 0
  %722 = vmatpush1.bf16.msra.mxu0 %v505
  %723 = vmatprep.subr.bf16.mxu0 0
  %724 = vmatpush2.bf16.msra.mxu0 0
  %725 = vmatprep.subr.bf16.mxu0 0
  %726 = vmatpush2.bf16.msra.mxu0 0
  %727 = vmatprep.subr.bf16.mxu0 0
  %728 = vmatpush2.bf16.msra.mxu0 0
  %729 = vmatprep.subr.bf16.mxu0 0
  %730 = vmatpush2.bf16.msra.mxu0 0
  %731 = vmatprep.subr.bf16.mxu0 0
  %732 = vmatpush2.bf16.msra.mxu0 0
  %733 = vmatprep.subr.bf16.mxu0 0
  %734 = vmatpush2.bf16.msra.mxu0 0
  %735 = vmatprep.subr.bf16.mxu0 0
  %736 = vmatpush2.bf16.msra.mxu0 0
  %737 = vmatprep.subr.bf16.mxu0 0
  %738 = vmatpush2.bf16.msra.mxu0 0
  %739 = vmatprep.mubr.bf16.mxu0 0
  %740 = vmatmul.mubr.bf16.gmra.mxu0 %v691
  %v741 = vpop.f32.mrf.mxu0
  %v742 = vadd.f32 0.0, %v741
  %v743 = vpop.f32.mrf.mxu0
  %v744 = vpop.f32.mrf.mxu0
  %v745 = vadd.f32 0.0, %v744
  %v746 = vpop.f32.mrf.mxu0
  %747 = vmatprep.mubr.bf16.mxu0 0
  %748 = vmatmul.mubr.bf16.gmra.mxu0 %v692
  %v749 = vpop.f32.mrf.mxu0
  %v750 = vadd.f32 0.0, %v749
  %v751 = vpop.f32.mrf.mxu0
  %v752 = vpop.f32.mrf.mxu0
  %v753 = vadd.f32 0.0, %v752
  %v754 = vpop.f32.mrf.mxu0
  %755 = vmatprep.mubr.bf16.mxu0 0
  %756 = vmatmul.mubr.bf16.gmra.mxu0 %v693
  %v757 = vpop.f32.mrf.mxu0
  %v758 = vadd.f32 0.0, %v757
  %v759 = vpop.f32.mrf.mxu0
  %v760 = vpop.f32.mrf.mxu0
  %v761 = vadd.f32 0.0, %v760
  %v762 = vpop.f32.mrf.mxu0
  %763 = vmatprep.mubr.bf16.mxu0 0
  %764 = vmatmul.mubr.bf16.gmra.mxu0 %v694
  %v765 = vpop.f32.mrf.mxu0
  %v766 = vadd.f32 0.0, %v765
  %v767 = vpop.f32.mrf.mxu0
  %v768 = vpop.f32.mrf.mxu0
  %v769 = vadd.f32 0.0, %v768
  %v770 = vpop.f32.mrf.mxu0
  %771 = vmatprep.mubr.bf16.mxu0 0
  %772 = vmatmul.mubr.bf16.gmra.mxu0 %v695
  %v773 = vpop.f32.mrf.mxu0
  %v774 = vadd.f32 0.0, %v773
  %v775 = vpop.f32.mrf.mxu0
  %v776 = vpop.f32.mrf.mxu0
  %v777 = vadd.f32 0.0, %v776
  %v778 = vpop.f32.mrf.mxu0
  %779 = vmatprep.mubr.bf16.mxu0 0
  %780 = vmatmul.mubr.bf16.gmra.mxu0 %v696
  %v781 = vpop.f32.mrf.mxu0
  %v782 = vadd.f32 0.0, %v781
  %v783 = vpop.f32.mrf.mxu0
  %v784 = vpop.f32.mrf.mxu0
  %v785 = vadd.f32 0.0, %v784
  %v786 = vpop.f32.mrf.mxu0
  %787 = vmatprep.mubr.bf16.mxu0 0
  %788 = vmatmul.mubr.bf16.gmra.mxu0 %v697
  %v789 = vpop.f32.mrf.mxu0
  %v790 = vadd.f32 0.0, %v789
  %v791 = vpop.f32.mrf.mxu0
  %v792 = vpop.f32.mrf.mxu0
  %v793 = vadd.f32 0.0, %v792
  %v794 = vpop.f32.mrf.mxu0
  %795 = vmatprep.mubr.bf16.mxu0 0
  %796 = vmatmul.mubr.bf16.gmra.mxu0 %v698
  %v797 = vpop.f32.mrf.mxu0
  %v798 = vadd.f32 0.0, %v797
  %v799 = vpop.f32.mrf.mxu0
  %v800 = vpop.f32.mrf.mxu0
  %v801 = vadd.f32 0.0, %v800
  %v802 = vpop.f32.mrf.mxu0
  %803 = vdwg.mxu0
  %v804 = vpack.c.bf16 %v745, %v742
  %v805 = vpack.c.bf16 %v753, %v750
  %v806 = vpack.c.bf16 %v761, %v758
  %v807 = vpack.c.bf16 %v769, %v766
  %v808 = vpack.c.bf16 %v777, %v774
  %v809 = vpack.c.bf16 %v785, %v782
  %v810 = vpack.c.bf16 %v793, %v790
  %v811 = vpack.c.bf16 %v801, %v798
  %v812 = vld [vmem:[%s8] sm:$0xf]
  %v813 = vld [vmem:[%s8 + $0x4] sm:$0xf]
  %v814 = vld [vmem:[%s8 + $0x8] sm:$0xf]
  %v815 = vld [vmem:[%s8 + $0xc] sm:$0xf]
  %v816 = vld [vmem:[%s8 + $0x10] sm:$0xf]
  %v817 = vld [vmem:[%s8 + $0x14] sm:$0xf]
  %v818 = vld [vmem:[%s8 + $0x18] sm:$0xf]
  %v819 = vld [vmem:[%s8 + $0x1c] sm:$0xf]
  %v820 = vld [vmem:[%s8 + $0x20] sm:$0xf]
  %v821 = vld [vmem:[%s8 + $0x24] sm:$0xf]
  %v822 = vld [vmem:[%s8 + $0x28] sm:$0xf]
  %v823 = vld [vmem:[%s8 + $0x2c] sm:$0xf]
  %v824 = vld [vmem:[%s8 + $0x30] sm:$0xf]
  %v825 = vld [vmem:[%s8 + $0x34] sm:$0xf]
  %v826 = vld [vmem:[%s8 + $0x38] sm:$0xf]
  %v827 = vld [vmem:[%s8 + $0x3c] sm:$0xf]
  %v828 = vld [vmem:[%s9] sm:$0x1]
  %v829 = vld [vmem:[%s10] sm:$0xf]
  %v830 = vld [vmem:[%s10 + $0x4] sm:$0xf]
  %v831 = vld [vmem:[%s10 + $0x8] sm:$0xf]
  %v832 = vld [vmem:[%s10 + $0xc] sm:$0xf]
  %v833 = vld [vmem:[%s10 + $0x10] sm:$0xf]
  %v834 = vld [vmem:[%s10 + $0x14] sm:$0xf]
  %v835 = vld [vmem:[%s10 + $0x18] sm:$0xf]
  %v836 = vld [vmem:[%s10 + $0x1c] sm:$0xf]
  %v837 = vld [vmem:[%s10 + $0x20] sm:$0xf]
  %v838 = vld [vmem:[%s10 + $0x24] sm:$0xf]
  %v839 = vld [vmem:[%s10 + $0x28] sm:$0xf]
  %v840 = vld [vmem:[%s10 + $0x2c] sm:$0xf]
  %v841 = vld [vmem:[%s10 + $0x30] sm:$0xf]
  %v842 = vld [vmem:[%s10 + $0x34] sm:$0xf]
  %v843 = vld [vmem:[%s10 + $0x38] sm:$0xf]
  %v844 = vld [vmem:[%s10 + $0x3c] sm:$0xf]
  %v845 = vld [vmem:[%s11] sm:$0x1]
  %v847 = vlaneseq
  %v848 = vshrl.u32 %v847, 7
  %v849 = vsub.s32 0, %v848
  %v850 = vrot.slane %v828, %v849
  %v868 = vunpack.c.l.b16 %v812
  %v869 = vunpack.c.l.b16 %v813
  %v870 = vunpack.c.l.b16 %v814
  %v871 = vunpack.c.l.b16 %v815
  %v872 = vunpack.c.l.b16 %v816
  %v873 = vunpack.c.l.b16 %v817
  %v874 = vunpack.c.l.b16 %v818
  %v875 = vunpack.c.l.b16 %v819
  %v876 = vunpack.c.l.b16 %v820
  %v877 = vunpack.c.l.b16 %v821
  %v878 = vunpack.c.l.b16 %v822
  %v879 = vunpack.c.l.b16 %v823
  %v880 = vunpack.c.l.b16 %v824
  %v881 = vunpack.c.l.b16 %v825
  %v882 = vunpack.c.l.b16 %v826
  %v883 = vunpack.c.l.b16 %v827
  %v884 = vpack.c.b16 %v869, %v868
  %v885 = vpack.c.b16 %v871, %v870
  %v886 = vpack.c.b16 %v873, %v872
  %v887 = vpack.c.b16 %v875, %v874
  %v888 = vpack.c.b16 %v877, %v876
  %v889 = vpack.c.b16 %v879, %v878
  %v890 = vpack.c.b16 %v881, %v880
  %v891 = vpack.c.b16 %v883, %v882
  %900 = vmatprep.subr.bf16.mxu0 0
  %901 = vmatpush1.bf16.msra.mxu0 %v891
  %902 = vmatprep.subr.bf16.mxu0 0
  %903 = vmatpush1.bf16.msra.mxu0 %v890
  %904 = vmatprep.subr.bf16.mxu0 0
  %905 = vmatpush1.bf16.msra.mxu0 %v889
  %906 = vmatprep.subr.bf16.mxu0 0
  %907 = vmatpush1.bf16.msra.mxu0 %v888
  %908 = vmatprep.subr.bf16.mxu0 0
  %909 = vmatpush1.bf16.msra.mxu0 %v887
  %910 = vmatprep.subr.bf16.mxu0 0
  %911 = vmatpush1.bf16.msra.mxu0 %v886
  %912 = vmatprep.subr.bf16.mxu0 0
  %913 = vmatpush1.bf16.msra.mxu0 %v885
  %914 = vmatprep.subr.bf16.mxu0 0
  %915 = vmatpush1.bf16.msra.mxu0 %v884
  %916 = vmatprep.subr.bf16.mxu0 0
  %917 = vmatpush2.bf16.msra.mxu0 0
  %918 = vmatprep.subr.bf16.mxu0 0
  %919 = vmatpush2.bf16.msra.mxu0 0
  %920 = vmatprep.subr.bf16.mxu0 0
  %921 = vmatpush2.bf16.msra.mxu0 0
  %922 = vmatprep.subr.bf16.mxu0 0
  %923 = vmatpush2.bf16.msra.mxu0 0
  %924 = vmatprep.subr.bf16.mxu0 0
  %925 = vmatpush2.bf16.msra.mxu0 0
  %926 = vmatprep.subr.bf16.mxu0 0
  %927 = vmatpush2.bf16.msra.mxu0 0
  %928 = vmatprep.subr.bf16.mxu0 0
  %929 = vmatpush2.bf16.msra.mxu0 0
  %930 = vmatprep.subr.bf16.mxu0 0
  %931 = vmatpush2.bf16.msra.mxu0 0
  %932 = vmatprep.mubr.bf16.mxu0 0
  %933 = vmatmul.mubr.bf16.gmra.mxu0 %v804
  %v934 = vpop.f32.mrf.mxu0
  %v935 = vadd.f32 %v850, %v934
  %v936 = vpop.f32.mrf.mxu0
  %v937 = vpop.f32.mrf.mxu0
  %v938 = vadd.f32 %v850, %v937
  %v939 = vpop.f32.mrf.mxu0
  %940 = vmatprep.mubr.bf16.mxu0 0
  %941 = vmatmul.mubr.bf16.gmra.mxu0 %v805
  %v942 = vpop.f32.mrf.mxu0
  %v943 = vadd.f32 %v850, %v942
  %v944 = vpop.f32.mrf.mxu0
  %v945 = vpop.f32.mrf.mxu0
  %v946 = vadd.f32 %v850, %v945
  %v947 = vpop.f32.mrf.mxu0
  %948 = vmatprep.mubr.bf16.mxu0 0
  %949 = vmatmul.mubr.bf16.gmra.mxu0 %v806
  %v950 = vpop.f32.mrf.mxu0
  %v951 = vadd.f32 %v850, %v950
  %v952 = vpop.f32.mrf.mxu0
  %v953 = vpop.f32.mrf.mxu0
  %v954 = vadd.f32 %v850, %v953
  %v955 = vpop.f32.mrf.mxu0
  %956 = vmatprep.mubr.bf16.mxu0 0
  %957 = vmatmul.mubr.bf16.gmra.mxu0 %v807
  %v958 = vpop.f32.mrf.mxu0
  %v959 = vadd.f32 %v850, %v958
  %v960 = vpop.f32.mrf.mxu0
  %v961 = vpop.f32.mrf.mxu0
  %v962 = vadd.f32 %v850, %v961
  %v963 = vpop.f32.mrf.mxu0
  %964 = vmatprep.mubr.bf16.mxu0 0
  %965 = vmatmul.mubr.bf16.gmra.mxu0 %v808
  %v966 = vpop.f32.mrf.mxu0
  %v967 = vadd.f32 %v850, %v966
  %v968 = vpop.f32.mrf.mxu0
  %v969 = vpop.f32.mrf.mxu0
  %v970 = vadd.f32 %v850, %v969
  %v971 = vpop.f32.mrf.mxu0
  %972 = vmatprep.mubr.bf16.mxu0 0
  %973 = vmatmul.mubr.bf16.gmra.mxu0 %v809
  %v974 = vpop.f32.mrf.mxu0
  %v975 = vadd.f32 %v850, %v974
  %v976 = vpop.f32.mrf.mxu0
  %v977 = vpop.f32.mrf.mxu0
  %v978 = vadd.f32 %v850, %v977
  %v979 = vpop.f32.mrf.mxu0
  %980 = vmatprep.mubr.bf16.mxu0 0
  %981 = vmatmul.mubr.bf16.gmra.mxu0 %v810
  %v982 = vpop.f32.mrf.mxu0
  %v983 = vadd.f32 %v850, %v982
  %v984 = vpop.f32.mrf.mxu0
  %v985 = vpop.f32.mrf.mxu0
  %v986 = vadd.f32 %v850, %v985
  %v987 = vpop.f32.mrf.mxu0
  %988 = vmatprep.mubr.bf16.mxu0 0
  %989 = vmatmul.mubr.bf16.gmra.mxu0 %v811
  %v990 = vpop.f32.mrf.mxu0
  %v991 = vadd.f32 %v850, %v990
  %v992 = vpop.f32.mrf.mxu0
  %v993 = vpop.f32.mrf.mxu0
  %v994 = vadd.f32 %v850, %v993
  %v995 = vpop.f32.mrf.mxu0
  %996 = vdwg.mxu0
  %v997 = vmax.f32 %v935, 0.0
  %v998 = vmax.f32 %v938, 0.0
  %v999 = vmax.f32 %v943, 0.0
  %v1000 = vmax.f32 %v946, 0.0
  %v1001 = vmax.f32 %v951, 0.0
  %v1002 = vmax.f32 %v954, 0.0
  %v1003 = vmax.f32 %v959, 0.0
  %v1004 = vmax.f32 %v962, 0.0
  %v1005 = vmax.f32 %v967, 0.0
  %v1006 = vmax.f32 %v970, 0.0
  %v1007 = vmax.f32 %v975, 0.0
  %v1008 = vmax.f32 %v978, 0.0
  %v1009 = vmax.f32 %v983, 0.0
  %v1010 = vmax.f32 %v986, 0.0
  %v1011 = vmax.f32 %v991, 0.0
  %v1012 = vmax.f32 %v994, 0.0
  %v1013 = vpack.c.bf16 %v998, %v997
  %v1014 = vpack.c.bf16 %v1000, %v999
  %v1015 = vpack.c.bf16 %v1002, %v1001
  %v1016 = vpack.c.bf16 %v1004, %v1003
  %v1017 = vpack.c.bf16 %v1006, %v1005
  %v1018 = vpack.c.bf16 %v1008, %v1007
  %v1019 = vpack.c.bf16 %v1010, %v1009
  %v1020 = vpack.c.bf16 %v1012, %v1011
  %v1022 = vlaneseq
  %v1023 = vshrl.u32 %v1022, 7
  %v1024 = vsub.s32 0, %v1023
  %v1025 = vrot.slane %v845, %v1024
  %v1043 = vunpack.c.l.b16 %v829
  %v1044 = vunpack.c.l.b16 %v830
  %v1045 = vunpack.c.l.b16 %v831
  %v1046 = vunpack.c.l.b16 %v832
  %v1047 = vunpack.c.l.b16 %v833
  %v1048 = vunpack.c.l.b16 %v834
  %v1049 = vunpack.c.l.b16 %v835
  %v1050 = vunpack.c.l.b16 %v836
  %v1051 = vunpack.c.l.b16 %v837
  %v1052 = vunpack.c.l.b16 %v838
  %v1053 = vunpack.c.l.b16 %v839
  %v1054 = vunpack.c.l.b16 %v840
  %v1055 = vunpack.c.l.b16 %v841
  %v1056 = vunpack.c.l.b16 %v842
  %v1057 = vunpack.c.l.b16 %v843
  %v1058 = vunpack.c.l.b16 %v844
  %v1059 = vpack.c.b16 %v1044, %v1043
  %v1060 = vpack.c.b16 %v1046, %v1045
  %v1061 = vpack.c.b16 %v1048, %v1047
  %v1062 = vpack.c.b16 %v1050, %v1049
  %v1063 = vpack.c.b16 %v1052, %v1051
  %v1064 = vpack.c.b16 %v1054, %v1053
  %v1065 = vpack.c.b16 %v1056, %v1055
  %v1066 = vpack.c.b16 %v1058, %v1057
  %1075 = vmatprep.subr.bf16.mxu0 0
  %1076 = vmatpush1.bf16.msra.mxu0 %v1066
  %1077 = vmatprep.subr.bf16.mxu0 0
  %1078 = vmatpush1.bf16.msra.mxu0 %v1065
  %1079 = vmatprep.subr.bf16.mxu0 0
  %1080 = vmatpush1.bf16.msra.mxu0 %v1064
  %1081 = vmatprep.subr.bf16.mxu0 0
  %1082 = vmatpush1.bf16.msra.mxu0 %v1063
  %1083 = vmatprep.subr.bf16.mxu0 0
  %1084 = vmatpush1.bf16.msra.mxu0 %v1062
  %1085 = vmatprep.subr.bf16.mxu0 0
  %1086 = vmatpush1.bf16.msra.mxu0 %v1061
  %1087 = vmatprep.subr.bf16.mxu0 0
  %1088 = vmatpush1.bf16.msra.mxu0 %v1060
  %1089 = vmatprep.subr.bf16.mxu0 0
  %1090 = vmatpush1.bf16.msra.mxu0 %v1059
  %1091 = vmatprep.subr.bf16.mxu0 0
  %1092 = vmatpush2.bf16.msra.mxu0 0
  %1093 = vmatprep.subr.bf16.mxu0 0
  %1094 = vmatpush2.bf16.msra.mxu0 0
  %1095 = vmatprep.subr.bf16.mxu0 0
  %1096 = vmatpush2.bf16.msra.mxu0 0
  %1097 = vmatprep.subr.bf16.mxu0 0
  %1098 = vmatpush2.bf16.msra.mxu0 0
  %1099 = vmatprep.subr.bf16.mxu0 0
  %1100 = vmatpush2.bf16.msra.mxu0 0
  %1101 = vmatprep.subr.bf16.mxu0 0
  %1102 = vmatpush2.bf16.msra.mxu0 0
  %1103 = vmatprep.subr.bf16.mxu0 0
  %1104 = vmatpush2.bf16.msra.mxu0 0
  %1105 = vmatprep.subr.bf16.mxu0 0
  %1106 = vmatpush2.bf16.msra.mxu0 0
  %1107 = vmatprep.mubr.bf16.mxu0 0
  %1108 = vmatmul.mubr.bf16.gmra.mxu0 %v1013
  %v1109 = vpop.f32.mrf.mxu0
  %v1110 = vadd.f32 %v1025, %v1109
  %v1111 = vpop.f32.mrf.mxu0
  %v1112 = vpop.f32.mrf.mxu0
  %v1113 = vadd.f32 %v1025, %v1112
  %v1114 = vpop.f32.mrf.mxu0
  %1115 = vmatprep.mubr.bf16.mxu0 0
  %1116 = vmatmul.mubr.bf16.gmra.mxu0 %v1014
  %v1117 = vpop.f32.mrf.mxu0
  %v1118 = vadd.f32 %v1025, %v1117
  %v1119 = vpop.f32.mrf.mxu0
  %v1120 = vpop.f32.mrf.mxu0
  %v1121 = vadd.f32 %v1025, %v1120
  %v1122 = vpop.f32.mrf.mxu0
  %1123 = vmatprep.mubr.bf16.mxu0 0
  %1124 = vmatmul.mubr.bf16.gmra.mxu0 %v1015
  %v1125 = vpop.f32.mrf.mxu0
  %v1126 = vadd.f32 %v1025, %v1125
  %v1127 = vpop.f32.mrf.mxu0
  %v1128 = vpop.f32.mrf.mxu0
  %v1129 = vadd.f32 %v1025, %v1128
  %v1130 = vpop.f32.mrf.mxu0
  %1131 = vmatprep.mubr.bf16.mxu0 0
  %1132 = vmatmul.mubr.bf16.gmra.mxu0 %v1016
  %v1133 = vpop.f32.mrf.mxu0
  %v1134 = vadd.f32 %v1025, %v1133
  %v1135 = vpop.f32.mrf.mxu0
  %v1136 = vpop.f32.mrf.mxu0
  %v1137 = vadd.f32 %v1025, %v1136
  %v1138 = vpop.f32.mrf.mxu0
  %1139 = vmatprep.mubr.bf16.mxu0 0
  %1140 = vmatmul.mubr.bf16.gmra.mxu0 %v1017
  %v1141 = vpop.f32.mrf.mxu0
  %v1142 = vadd.f32 %v1025, %v1141
  %v1143 = vpop.f32.mrf.mxu0
  %v1144 = vpop.f32.mrf.mxu0
  %v1145 = vadd.f32 %v1025, %v1144
  %v1146 = vpop.f32.mrf.mxu0
  %1147 = vmatprep.mubr.bf16.mxu0 0
  %1148 = vmatmul.mubr.bf16.gmra.mxu0 %v1018
  %v1149 = vpop.f32.mrf.mxu0
  %v1150 = vadd.f32 %v1025, %v1149
  %v1151 = vpop.f32.mrf.mxu0
  %v1152 = vpop.f32.mrf.mxu0
  %v1153 = vadd.f32 %v1025, %v1152
  %v1154 = vpop.f32.mrf.mxu0
  %1155 = vmatprep.mubr.bf16.mxu0 0
  %1156 = vmatmul.mubr.bf16.gmra.mxu0 %v1019
  %v1157 = vpop.f32.mrf.mxu0
  %v1158 = vadd.f32 %v1025, %v1157
  %v1159 = vpop.f32.mrf.mxu0
  %v1160 = vpop.f32.mrf.mxu0
  %v1161 = vadd.f32 %v1025, %v1160
  %v1162 = vpop.f32.mrf.mxu0
  %1163 = vmatprep.mubr.bf16.mxu0 0
  %1164 = vmatmul.mubr.bf16.gmra.mxu0 %v1020
  %v1165 = vpop.f32.mrf.mxu0
  %v1166 = vadd.f32 %v1025, %v1165
  %v1167 = vpop.f32.mrf.mxu0
  %v1168 = vpop.f32.mrf.mxu0
  %v1169 = vadd.f32 %v1025, %v1168
  %v1170 = vpop.f32.mrf.mxu0
  %1171 = vdwg.mxu0
  %v1172 = vmax.f32 %v1110, 0.0
  %v1173 = vmax.f32 %v1113, 0.0
  %v1174 = vmax.f32 %v1118, 0.0
  %v1175 = vmax.f32 %v1121, 0.0
  %v1176 = vmax.f32 %v1126, 0.0
  %v1177 = vmax.f32 %v1129, 0.0
  %v1178 = vmax.f32 %v1134, 0.0
  %v1179 = vmax.f32 %v1137, 0.0
  %v1180 = vmax.f32 %v1142, 0.0
  %v1181 = vmax.f32 %v1145, 0.0
  %v1182 = vmax.f32 %v1150, 0.0
  %v1183 = vmax.f32 %v1153, 0.0
  %v1184 = vmax.f32 %v1158, 0.0
  %v1185 = vmax.f32 %v1161, 0.0
  %v1186 = vmax.f32 %v1166, 0.0
  %v1187 = vmax.f32 %v1169, 0.0
  %v1188 = vpack.c.bf16 %v1173, %v1172
  %v1189 = vpack.c.bf16 %v1175, %v1174
  %v1190 = vpack.c.bf16 %v1177, %v1176
  %v1191 = vpack.c.bf16 %v1179, %v1178
  %v1192 = vpack.c.bf16 %v1181, %v1180
  %v1193 = vpack.c.bf16 %v1183, %v1182
  %v1194 = vpack.c.bf16 %v1185, %v1184
  %v1195 = vpack.c.bf16 %v1187, %v1186
  %1196 = vmatprep.subr.bf16.mxu0 0
  %1197 = vmatpush1.bf16.msra.mxu0 %v1195
  %1198 = vmatprep.subr.bf16.mxu0 0
  %1199 = vmatpush1.bf16.msra.mxu0 %v1194
  %1200 = vmatprep.subr.bf16.mxu0 0
  %1201 = vmatpush1.bf16.msra.mxu0 %v1193
  %1202 = vmatprep.subr.bf16.mxu0 0
  %1203 = vmatpush1.bf16.msra.mxu0 %v1192
  %1204 = vmatprep.subr.bf16.mxu0 0
  %1205 = vmatpush1.bf16.msra.mxu0 %v1191
  %1206 = vmatprep.subr.bf16.mxu0 0
  %1207 = vmatpush1.bf16.msra.mxu0 %v1190
  %1208 = vmatprep.subr.bf16.mxu0 0
  %1209 = vmatpush1.bf16.msra.mxu0 %v1189
  %1210 = vmatprep.subr.bf16.mxu0 0
  %1211 = vmatpush1.bf16.msra.mxu0 %v1188
  %1212 = vmatprep.subr.bf16.mxu0 0
  %1213 = vmatpush2.bf16.msra.mxu0 0
  %1214 = vmatprep.subr.bf16.mxu0 0
  %1215 = vmatpush2.bf16.msra.mxu0 0
  %1216 = vmatprep.subr.bf16.mxu0 0
  %1217 = vmatpush2.bf16.msra.mxu0 0
  %1218 = vmatprep.subr.bf16.mxu0 0
  %1219 = vmatpush2.bf16.msra.mxu0 0
  %1220 = vmatprep.subr.bf16.mxu0 0
  %1221 = vmatpush2.bf16.msra.mxu0 0
  %1222 = vmatprep.subr.bf16.mxu0 0
  %1223 = vmatpush2.bf16.msra.mxu0 0
  %1224 = vmatprep.subr.bf16.mxu0 0
  %1225 = vmatpush2.bf16.msra.mxu0 0
  %1226 = vmatprep.subr.bf16.mxu0 0
  %1227 = vmatpush2.bf16.msra.mxu0 0
  %1228 = vmatprep.mubr.bf16.mxu0 0
  %1229 = vmatmul.mubr.bf16.gmra.mxu0 %v64
  %v1230 = vpop.f32.mrf.mxu0
  %v1231 = vadd.f32 0.0, %v1230
  %v1232 = vpop.f32.mrf.mxu0
  %v1233 = vpop.f32.mrf.mxu0
  %v1234 = vpop.f32.mrf.mxu0
  %1235 = vdwg.mxu0
  %v1236 = vpack.c.bf16 %v1231, %v1231
  %s1237 = scalar_lea.vmem %s12, 64
  %v1238 = vld [vmem:[%s1237] sm:$0xf]
  %v1239 = vld [vmem:[%s1237 + $0x4] sm:$0xf]
  %v1240 = vld [vmem:[%s1237 + $0x8] sm:$0xf]
  %v1241 = vld [vmem:[%s1237 + $0xc] sm:$0xf]
  %v1242 = vld [vmem:[%s1237 + $0x10] sm:$0xf]
  %v1243 = vld [vmem:[%s1237 + $0x14] sm:$0xf]
  %v1244 = vld [vmem:[%s1237 + $0x18] sm:$0xf]
  %v1245 = vld [vmem:[%s1237 + $0x1c] sm:$0xf]
  %v1246 = vld [vmem:[%s1237 + $0x20] sm:$0xf]
  %v1247 = vld [vmem:[%s1237 + $0x24] sm:$0xf]
  %v1248 = vld [vmem:[%s1237 + $0x28] sm:$0xf]
  %v1249 = vld [vmem:[%s1237 + $0x2c] sm:$0xf]
  %v1250 = vld [vmem:[%s1237 + $0x30] sm:$0xf]
  %v1251 = vld [vmem:[%s1237 + $0x34] sm:$0xf]
  %v1252 = vld [vmem:[%s1237 + $0x38] sm:$0xf]
  %v1253 = vld [vmem:[%s1237 + $0x3c] sm:$0xf]
  %s1254 = scalar_lea.vmem %s13, 1
  %v1255 = vld [vmem:[%s1254] sm:$0x1]
  %v1257 = vlaneseq
  %v1258 = vshrl.u32 %v1257, 7
  %v1259 = vsub.s32 0, %v1258
  %v1260 = vrot.slane %v1255, %v1259
  %v1278 = vunpack.c.l.b16 %v1238
  %v1279 = vunpack.c.l.b16 %v1239
  %v1280 = vunpack.c.l.b16 %v1240
  %v1281 = vunpack.c.l.b16 %v1241
  %v1282 = vunpack.c.l.b16 %v1242
  %v1283 = vunpack.c.l.b16 %v1243
  %v1284 = vunpack.c.l.b16 %v1244
  %v1285 = vunpack.c.l.b16 %v1245
  %v1286 = vunpack.c.l.b16 %v1246
  %v1287 = vunpack.c.l.b16 %v1247
  %v1288 = vunpack.c.l.b16 %v1248
  %v1289 = vunpack.c.l.b16 %v1249
  %v1290 = vunpack.c.l.b16 %v1250
  %v1291 = vunpack.c.l.b16 %v1251
  %v1292 = vunpack.c.l.b16 %v1252
  %v1293 = vunpack.c.l.b16 %v1253
  %v1294 = vpack.c.b16 %v1279, %v1278
  %v1295 = vpack.c.b16 %v1281, %v1280
  %v1296 = vpack.c.b16 %v1283, %v1282
  %v1297 = vpack.c.b16 %v1285, %v1284
  %v1298 = vpack.c.b16 %v1287, %v1286
  %v1299 = vpack.c.b16 %v1289, %v1288
  %v1300 = vpack.c.b16 %v1291, %v1290
  %v1301 = vpack.c.b16 %v1293, %v1292
  %1310 = vmatprep.subr.bf16.mxu0 0
  %1311 = vmatpush1.bf16.msra.mxu0 %v1301
  %1312 = vmatprep.subr.bf16.mxu0 0
  %1313 = vmatpush1.bf16.msra.mxu0 %v1300
  %1314 = vmatprep.subr.bf16.mxu0 0
  %1315 = vmatpush1.bf16.msra.mxu0 %v1299
  %1316 = vmatprep.subr.bf16.mxu0 0
  %1317 = vmatpush1.bf16.msra.mxu0 %v1298
  %1318 = vmatprep.subr.bf16.mxu0 0
  %1319 = vmatpush1.bf16.msra.mxu0 %v1297
  %1320 = vmatprep.subr.bf16.mxu0 0
  %1321 = vmatpush1.bf16.msra.mxu0 %v1296
  %1322 = vmatprep.subr.bf16.mxu0 0
  %1323 = vmatpush1.bf16.msra.mxu0 %v1295
  %1324 = vmatprep.subr.bf16.mxu0 0
  %1325 = vmatpush1.bf16.msra.mxu0 %v1294
  %1326 = vmatprep.subr.bf16.mxu0 0
  %1327 = vmatpush2.bf16.msra.mxu0 0
  %1328 = vmatprep.subr.bf16.mxu0 0
  %1329 = vmatpush2.bf16.msra.mxu0 0
  %1330 = vmatprep.subr.bf16.mxu0 0
  %1331 = vmatpush2.bf16.msra.mxu0 0
  %1332 = vmatprep.subr.bf16.mxu0 0
  %1333 = vmatpush2.bf16.msra.mxu0 0
  %1334 = vmatprep.subr.bf16.mxu0 0
  %1335 = vmatpush2.bf16.msra.mxu0 0
  %1336 = vmatprep.subr.bf16.mxu0 0
  %1337 = vmatpush2.bf16.msra.mxu0 0
  %1338 = vmatprep.subr.bf16.mxu0 0
  %1339 = vmatpush2.bf16.msra.mxu0 0
  %1340 = vmatprep.subr.bf16.mxu0 0
  %1341 = vmatpush2.bf16.msra.mxu0 0
  %1342 = vmatprep.mubr.bf16.mxu0 0
  %1343 = vmatmul.mubr.bf16.gmra.mxu0 %v1236
  %v1344 = vpop.f32.mrf.mxu0
  %v1345 = vadd.f32 %v1260, %v1344
  %v1346 = vpop.f32.mrf.mxu0
  %v1347 = vpop.f32.mrf.mxu0
  %v1348 = vpop.f32.mrf.mxu0
  %1349 = vdwg.mxu0
  %v1350 = vadd.f32 %v654, %v1345
  %1351 = vmatprep.subr.bf16.mxu0 0
  %1352 = vmatpush1.bf16.msra.mxu0 %v1195
  %1353 = vmatprep.subr.bf16.mxu0 0
  %1354 = vmatpush1.bf16.msra.mxu0 %v1194
  %1355 = vmatprep.subr.bf16.mxu0 0
  %1356 = vmatpush1.bf16.msra.mxu0 %v1193
  %1357 = vmatprep.subr.bf16.mxu0 0
  %1358 = vmatpush1.bf16.msra.mxu0 %v1192
  %1359 = vmatprep.subr.bf16.mxu0 0
  %1360 = vmatpush1.bf16.msra.mxu0 %v1191
  %1361 = vmatprep.subr.bf16.mxu0 0
  %1362 = vmatpush1.bf16.msra.mxu0 %v1190
  %1363 = vmatprep.subr.bf16.mxu0 0
  %1364 = vmatpush1.bf16.msra.mxu0 %v1189
  %1365 = vmatprep.subr.bf16.mxu0 0
  %1366 = vmatpush1.bf16.msra.mxu0 %v1188
  %1367 = vmatprep.subr.bf16.mxu0 0
  %1368 = vmatpush2.bf16.msra.mxu0 0
  %1369 = vmatprep.subr.bf16.mxu0 0
  %1370 = vmatpush2.bf16.msra.mxu0 0
  %1371 = vmatprep.subr.bf16.mxu0 0
  %1372 = vmatpush2.bf16.msra.mxu0 0
  %1373 = vmatprep.subr.bf16.mxu0 0
  %1374 = vmatpush2.bf16.msra.mxu0 0
  %1375 = vmatprep.subr.bf16.mxu0 0
  %1376 = vmatpush2.bf16.msra.mxu0 0
  %1377 = vmatprep.subr.bf16.mxu0 0
  %1378 = vmatpush2.bf16.msra.mxu0 0
  %1379 = vmatprep.subr.bf16.mxu0 0
  %1380 = vmatpush2.bf16.msra.mxu0 0
  %1381 = vmatprep.subr.bf16.mxu0 0
  %1382 = vmatpush2.bf16.msra.mxu0 0
  %1383 = vmatprep.mubr.bf16.mxu0 0
  %1384 = vmatmul.mubr.bf16.gmra.mxu0 %v691
  %v1385 = vpop.f32.mrf.mxu0
  %v1386 = vadd.f32 0.0, %v1385
  %v1387 = vpop.f32.mrf.mxu0
  %v1388 = vpop.f32.mrf.mxu0
  %v1389 = vadd.f32 0.0, %v1388
  %v1390 = vpop.f32.mrf.mxu0
  %1391 = vmatprep.mubr.bf16.mxu0 0
  %1392 = vmatmul.mubr.bf16.gmra.mxu0 %v692
  %v1393 = vpop.f32.mrf.mxu0
  %v1394 = vadd.f32 0.0, %v1393
  %v1395 = vpop.f32.mrf.mxu0
  %v1396 = vpop.f32.mrf.mxu0
  %v1397 = vadd.f32 0.0, %v1396
  %v1398 = vpop.f32.mrf.mxu0
  %1399 = vmatprep.mubr.bf16.mxu0 0
  %1400 = vmatmul.mubr.bf16.gmra.mxu0 %v693
  %v1401 = vpop.f32.mrf.mxu0
  %v1402 = vadd.f32 0.0, %v1401
  %v1403 = vpop.f32.mrf.mxu0
  %v1404 = vpop.f32.mrf.mxu0
  %v1405 = vadd.f32 0.0, %v1404
  %v1406 = vpop.f32.mrf.mxu0
  %1407 = vmatprep.mubr.bf16.mxu0 0
  %1408 = vmatmul.mubr.bf16.gmra.mxu0 %v694
  %v1409 = vpop.f32.mrf.mxu0
  %v1410 = vadd.f32 0.0, %v1409
  %v1411 = vpop.f32.mrf.mxu0
  %v1412 = vpop.f32.mrf.mxu0
  %v1413 = vadd.f32 0.0, %v1412
  %v1414 = vpop.f32.mrf.mxu0
  %1415 = vmatprep.mubr.bf16.mxu0 0
  %1416 = vmatmul.mubr.bf16.gmra.mxu0 %v695
  %v1417 = vpop.f32.mrf.mxu0
  %v1418 = vadd.f32 0.0, %v1417
  %v1419 = vpop.f32.mrf.mxu0
  %v1420 = vpop.f32.mrf.mxu0
  %v1421 = vadd.f32 0.0, %v1420
  %v1422 = vpop.f32.mrf.mxu0
  %1423 = vmatprep.mubr.bf16.mxu0 0
  %1424 = vmatmul.mubr.bf16.gmra.mxu0 %v696
  %v1425 = vpop.f32.mrf.mxu0
  %v1426 = vadd.f32 0.0, %v1425
  %v1427 = vpop.f32.mrf.mxu0
  %v1428 = vpop.f32.mrf.mxu0
  %v1429 = vadd.f32 0.0, %v1428
  %v1430 = vpop.f32.mrf.mxu0
  %1431 = vmatprep.mubr.bf16.mxu0 0
  %1432 = vmatmul.mubr.bf16.gmra.mxu0 %v697
  %v1433 = vpop.f32.mrf.mxu0
  %v1434 = vadd.f32 0.0, %v1433
  %v1435 = vpop.f32.mrf.mxu0
  %v1436 = vpop.f32.mrf.mxu0
  %v1437 = vadd.f32 0.0, %v1436
  %v1438 = vpop.f32.mrf.mxu0
  %1439 = vmatprep.mubr.bf16.mxu0 0
  %1440 = vmatmul.mubr.bf16.gmra.mxu0 %v698
  %v1441 = vpop.f32.mrf.mxu0
  %v1442 = vadd.f32 0.0, %v1441
  %v1443 = vpop.f32.mrf.mxu0
  %v1444 = vpop.f32.mrf.mxu0
  %v1445 = vadd.f32 0.0, %v1444
  %v1446 = vpop.f32.mrf.mxu0
  %1447 = vdwg.mxu0
  %v1448 = vpack.c.bf16 %v1389, %v1386
  %v1449 = vpack.c.bf16 %v1397, %v1394
  %v1450 = vpack.c.bf16 %v1405, %v1402
  %v1451 = vpack.c.bf16 %v1413, %v1410
  %v1452 = vpack.c.bf16 %v1421, %v1418
  %v1453 = vpack.c.bf16 %v1429, %v1426
  %v1454 = vpack.c.bf16 %v1437, %v1434
  %v1455 = vpack.c.bf16 %v1445, %v1442
  %s1456 = scalar_lea.vmem %s8, 64
  %v1457 = vld [vmem:[%s1456] sm:$0xf]
  %v1458 = vld [vmem:[%s1456 + $0x4] sm:$0xf]
  %v1459 = vld [vmem:[%s1456 + $0x8] sm:$0xf]
  %v1460 = vld [vmem:[%s1456 + $0xc] sm:$0xf]
  %v1461 = vld [vmem:[%s1456 + $0x10] sm:$0xf]
  %v1462 = vld [vmem:[%s1456 + $0x14] sm:$0xf]
  %v1463 = vld [vmem:[%s1456 + $0x18] sm:$0xf]
  %v1464 = vld [vmem:[%s1456 + $0x1c] sm:$0xf]
  %v1465 = vld [vmem:[%s1456 + $0x20] sm:$0xf]
  %v1466 = vld [vmem:[%s1456 + $0x24] sm:$0xf]
  %v1467 = vld [vmem:[%s1456 + $0x28] sm:$0xf]
  %v1468 = vld [vmem:[%s1456 + $0x2c] sm:$0xf]
  %v1469 = vld [vmem:[%s1456 + $0x30] sm:$0xf]
  %v1470 = vld [vmem:[%s1456 + $0x34] sm:$0xf]
  %v1471 = vld [vmem:[%s1456 + $0x38] sm:$0xf]
  %v1472 = vld [vmem:[%s1456 + $0x3c] sm:$0xf]
  %s1473 = scalar_lea.vmem %s9, 1
  %v1474 = vld [vmem:[%s1473] sm:$0x1]
  %s1475 = scalar_lea.vmem %s10, 64
  %v1476 = vld [vmem:[%s1475] sm:$0xf]
  %v1477 = vld [vmem:[%s1475 + $0x4] sm:$0xf]
  %v1478 = vld [vmem:[%s1475 + $0x8] sm:$0xf]
  %v1479 = vld [vmem:[%s1475 + $0xc] sm:$0xf]
  %v1480 = vld [vmem:[%s1475 + $0x10] sm:$0xf]
  %v1481 = vld [vmem:[%s1475 + $0x14] sm:$0xf]
  %v1482 = vld [vmem:[%s1475 + $0x18] sm:$0xf]
  %v1483 = vld [vmem:[%s1475 + $0x1c] sm:$0xf]
  %v1484 = vld [vmem:[%s1475 + $0x20] sm:$0xf]
  %v1485 = vld [vmem:[%s1475 + $0x24] sm:$0xf]
  %v1486 = vld [vmem:[%s1475 + $0x28] sm:$0xf]
  %v1487 = vld [vmem:[%s1475 + $0x2c] sm:$0xf]
  %v1488 = vld [vmem:[%s1475 + $0x30] sm:$0xf]
  %v1489 = vld [vmem:[%s1475 + $0x34] sm:$0xf]
  %v1490 = vld [vmem:[%s1475 + $0x38] sm:$0xf]
  %v1491 = vld [vmem:[%s1475 + $0x3c] sm:$0xf]
  %s1492 = scalar_lea.vmem %s11, 1
  %v1493 = vld [vmem:[%s1492] sm:$0x1]
  %v1495 = vlaneseq
  %v1496 = vshrl.u32 %v1495, 7
  %v1497 = vsub.s32 0, %v1496
  %v1498 = vrot.slane %v1474, %v1497
  %v1516 = vunpack.c.l.b16 %v1457
  %v1517 = vunpack.c.l.b16 %v1458
  %v1518 = vunpack.c.l.b16 %v1459
  %v1519 = vunpack.c.l.b16 %v1460
  %v1520 = vunpack.c.l.b16 %v1461
  %v1521 = vunpack.c.l.b16 %v1462
  %v1522 = vunpack.c.l.b16 %v1463
  %v1523 = vunpack.c.l.b16 %v1464
  %v1524 = vunpack.c.l.b16 %v1465
  %v1525 = vunpack.c.l.b16 %v1466
  %v1526 = vunpack.c.l.b16 %v1467
  %v1527 = vunpack.c.l.b16 %v1468
  %v1528 = vunpack.c.l.b16 %v1469
  %v1529 = vunpack.c.l.b16 %v1470
  %v1530 = vunpack.c.l.b16 %v1471
  %v1531 = vunpack.c.l.b16 %v1472
  %v1532 = vpack.c.b16 %v1517, %v1516
  %v1533 = vpack.c.b16 %v1519, %v1518
  %v1534 = vpack.c.b16 %v1521, %v1520
  %v1535 = vpack.c.b16 %v1523, %v1522
  %v1536 = vpack.c.b16 %v1525, %v1524
  %v1537 = vpack.c.b16 %v1527, %v1526
  %v1538 = vpack.c.b16 %v1529, %v1528
  %v1539 = vpack.c.b16 %v1531, %v1530
  %1548 = vmatprep.subr.bf16.mxu0 0
  %1549 = vmatpush1.bf16.msra.mxu0 %v1539
  %1550 = vmatprep.subr.bf16.mxu0 0
  %1551 = vmatpush1.bf16.msra.mxu0 %v1538
  %1552 = vmatprep.subr.bf16.mxu0 0
  %1553 = vmatpush1.bf16.msra.mxu0 %v1537
  %1554 = vmatprep.subr.bf16.mxu0 0
  %1555 = vmatpush1.bf16.msra.mxu0 %v1536
  %1556 = vmatprep.subr.bf16.mxu0 0
  %1557 = vmatpush1.bf16.msra.mxu0 %v1535
  %1558 = vmatprep.subr.bf16.mxu0 0
  %1559 = vmatpush1.bf16.msra.mxu0 %v1534
  %1560 = vmatprep.subr.bf16.mxu0 0
  %1561 = vmatpush1.bf16.msra.mxu0 %v1533
  %1562 = vmatprep.subr.bf16.mxu0 0
  %1563 = vmatpush1.bf16.msra.mxu0 %v1532
  %1564 = vmatprep.subr.bf16.mxu0 0
  %1565 = vmatpush2.bf16.msra.mxu0 0
  %1566 = vmatprep.subr.bf16.mxu0 0
  %1567 = vmatpush2.bf16.msra.mxu0 0
  %1568 = vmatprep.subr.bf16.mxu0 0
  %1569 = vmatpush2.bf16.msra.mxu0 0
  %1570 = vmatprep.subr.bf16.mxu0 0
  %1571 = vmatpush2.bf16.msra.mxu0 0
  %1572 = vmatprep.subr.bf16.mxu0 0
  %1573 = vmatpush2.bf16.msra.mxu0 0
  %1574 = vmatprep.subr.bf16.mxu0 0
  %1575 = vmatpush2.bf16.msra.mxu0 0
  %1576 = vmatprep.subr.bf16.mxu0 0
  %1577 = vmatpush2.bf16.msra.mxu0 0
  %1578 = vmatprep.subr.bf16.mxu0 0
  %1579 = vmatpush2.bf16.msra.mxu0 0
  %1580 = vmatprep.mubr.bf16.mxu0 0
  %1581 = vmatmul.mubr.bf16.gmra.mxu0 %v1448
  %v1582 = vpop.f32.mrf.mxu0
  %v1583 = vadd.f32 %v1498, %v1582
  %v1584 = vpop.f32.mrf.mxu0
  %v1585 = vpop.f32.mrf.mxu0
  %v1586 = vadd.f32 %v1498, %v1585
  %v1587 = vpop.f32.mrf.mxu0
  %1588 = vmatprep.mubr.bf16.mxu0 0
  %1589 = vmatmul.mubr.bf16.gmra.mxu0 %v1449
  %v1590 = vpop.f32.mrf.mxu0
  %v1591 = vadd.f32 %v1498, %v1590
  %v1592 = vpop.f32.mrf.mxu0
  %v1593 = vpop.f32.mrf.mxu0
  %v1594 = vadd.f32 %v1498, %v1593
  %v1595 = vpop.f32.mrf.mxu0
  %1596 = vmatprep.mubr.bf16.mxu0 0
  %1597 = vmatmul.mubr.bf16.gmra.mxu0 %v1450
  %v1598 = vpop.f32.mrf.mxu0
  %v1599 = vadd.f32 %v1498, %v1598
  %v1600 = vpop.f32.mrf.mxu0
  %v1601 = vpop.f32.mrf.mxu0
  %v1602 = vadd.f32 %v1498, %v1601
  %v1603 = vpop.f32.mrf.mxu0
  %1604 = vmatprep.mubr.bf16.mxu0 0
  %1605 = vmatmul.mubr.bf16.gmra.mxu0 %v1451
  %v1606 = vpop.f32.mrf.mxu0
  %v1607 = vadd.f32 %v1498, %v1606
  %v1608 = vpop.f32.mrf.mxu0
  %v1609 = vpop.f32.mrf.mxu0
  %v1610 = vadd.f32 %v1498, %v1609
  %v1611 = vpop.f32.mrf.mxu0
  %1612 = vmatprep.mubr.bf16.mxu0 0
  %1613 = vmatmul.mubr.bf16.gmra.mxu0 %v1452
  %v1614 = vpop.f32.mrf.mxu0
  %v1615 = vadd.f32 %v1498, %v1614
  %v1616 = vpop.f32.mrf.mxu0
  %v1617 = vpop.f32.mrf.mxu0
  %v1618 = vadd.f32 %v1498, %v1617
  %v1619 = vpop.f32.mrf.mxu0
  %1620 = vmatprep.mubr.bf16.mxu0 0
  %1621 = vmatmul.mubr.bf16.gmra.mxu0 %v1453
  %v1622 = vpop.f32.mrf.mxu0
  %v1623 = vadd.f32 %v1498, %v1622
  %v1624 = vpop.f32.mrf.mxu0
  %v1625 = vpop.f32.mrf.mxu0
  %v1626 = vadd.f32 %v1498, %v1625
  %v1627 = vpop.f32.mrf.mxu0
  %1628 = vmatprep.mubr.bf16.mxu0 0
  %1629 = vmatmul.mubr.bf16.gmra.mxu0 %v1454
  %v1630 = vpop.f32.mrf.mxu0
  %v1631 = vadd.f32 %v1498, %v1630
  %v1632 = vpop.f32.mrf.mxu0
  %v1633 = vpop.f32.mrf.mxu0
  %v1634 = vadd.f32 %v1498, %v1633
  %v1635 = vpop.f32.mrf.mxu0
  %1636 = vmatprep.mubr.bf16.mxu0 0
  %1637 = vmatmul.mubr.bf16.gmra.mxu0 %v1455
  %v1638 = vpop.f32.mrf.mxu0
  %v1639 = vadd.f32 %v1498, %v1638
  %v1640 = vpop.f32.mrf.mxu0
  %v1641 = vpop.f32.mrf.mxu0
  %v1642 = vadd.f32 %v1498, %v1641
  %v1643 = vpop.f32.mrf.mxu0
  %1644 = vdwg.mxu0
  %v1645 = vmax.f32 %v1583, 0.0
  %v1646 = vmax.f32 %v1586, 0.0
  %v1647 = vmax.f32 %v1591, 0.0
  %v1648 = vmax.f32 %v1594, 0.0
  %v1649 = vmax.f32 %v1599, 0.0
  %v1650 = vmax.f32 %v1602, 0.0
  %v1651 = vmax.f32 %v1607, 0.0
  %v1652 = vmax.f32 %v1610, 0.0
  %v1653 = vmax.f32 %v1615, 0.0
  %v1654 = vmax.f32 %v1618, 0.0
  %v1655 = vmax.f32 %v1623, 0.0
  %v1656 = vmax.f32 %v1626, 0.0
  %v1657 = vmax.f32 %v1631, 0.0
  %v1658 = vmax.f32 %v1634, 0.0
  %v1659 = vmax.f32 %v1639, 0.0
  %v1660 = vmax.f32 %v1642, 0.0
  %v1661 = vpack.c.bf16 %v1646, %v1645
  %v1662 = vpack.c.bf16 %v1648, %v1647
  %v1663 = vpack.c.bf16 %v1650, %v1649
  %v1664 = vpack.c.bf16 %v1652, %v1651
  %v1665 = vpack.c.bf16 %v1654, %v1653
  %v1666 = vpack.c.bf16 %v1656, %v1655
  %v1667 = vpack.c.bf16 %v1658, %v1657
  %v1668 = vpack.c.bf16 %v1660, %v1659
  %v1670 = vlaneseq
  %v1671 = vshrl.u32 %v1670, 7
  %v1672 = vsub.s32 0, %v1671
  %v1673 = vrot.slane %v1493, %v1672
  %v1691 = vunpack.c.l.b16 %v1476
  %v1692 = vunpack.c.l.b16 %v1477
  %v1693 = vunpack.c.l.b16 %v1478
  %v1694 = vunpack.c.l.b16 %v1479
  %v1695 = vunpack.c.l.b16 %v1480
  %v1696 = vunpack.c.l.b16 %v1481
  %v1697 = vunpack.c.l.b16 %v1482
  %v1698 = vunpack.c.l.b16 %v1483
  %v1699 = vunpack.c.l.b16 %v1484
  %v1700 = vunpack.c.l.b16 %v1485
  %v1701 = vunpack.c.l.b16 %v1486
  %v1702 = vunpack.c.l.b16 %v1487
  %v1703 = vunpack.c.l.b16 %v1488
  %v1704 = vunpack.c.l.b16 %v1489
  %v1705 = vunpack.c.l.b16 %v1490
  %v1706 = vunpack.c.l.b16 %v1491
  %v1707 = vpack.c.b16 %v1692, %v1691
  %v1708 = vpack.c.b16 %v1694, %v1693
  %v1709 = vpack.c.b16 %v1696, %v1695
  %v1710 = vpack.c.b16 %v1698, %v1697
  %v1711 = vpack.c.b16 %v1700, %v1699
  %v1712 = vpack.c.b16 %v1702, %v1701
  %v1713 = vpack.c.b16 %v1704, %v1703
  %v1714 = vpack.c.b16 %v1706, %v1705
  %1723 = vmatprep.subr.bf16.mxu0 0
  %1724 = vmatpush1.bf16.msra.mxu0 %v1714
  %1725 = vmatprep.subr.bf16.mxu0 0
  %1726 = vmatpush1.bf16.msra.mxu0 %v1713
  %1727 = vmatprep.subr.bf16.mxu0 0
  %1728 = vmatpush1.bf16.msra.mxu0 %v1712
  %1729 = vmatprep.subr.bf16.mxu0 0
  %1730 = vmatpush1.bf16.msra.mxu0 %v1711
  %1731 = vmatprep.subr.bf16.mxu0 0
  %1732 = vmatpush1.bf16.msra.mxu0 %v1710
  %1733 = vmatprep.subr.bf16.mxu0 0
  %1734 = vmatpush1.bf16.msra.mxu0 %v1709
  %1735 = vmatprep.subr.bf16.mxu0 0
  %1736 = vmatpush1.bf16.msra.mxu0 %v1708
  %1737 = vmatprep.subr.bf16.mxu0 0
  %1738 = vmatpush1.bf16.msra.mxu0 %v1707
  %1739 = vmatprep.subr.bf16.mxu0 0
  %1740 = vmatpush2.bf16.msra.mxu0 0
  %1741 = vmatprep.subr.bf16.mxu0 0
  %1742 = vmatpush2.bf16.msra.mxu0 0
  %1743 = vmatprep.subr.bf16.mxu0 0
  %1744 = vmatpush2.bf16.msra.mxu0 0
  %1745 = vmatprep.subr.bf16.mxu0 0
  %1746 = vmatpush2.bf16.msra.mxu0 0
  %1747 = vmatprep.subr.bf16.mxu0 0
  %1748 = vmatpush2.bf16.msra.mxu0 0
  %1749 = vmatprep.subr.bf16.mxu0 0
  %1750 = vmatpush2.bf16.msra.mxu0 0
  %1751 = vmatprep.subr.bf16.mxu0 0
  %1752 = vmatpush2.bf16.msra.mxu0 0
  %1753 = vmatprep.subr.bf16.mxu0 0
  %1754 = vmatpush2.bf16.msra.mxu0 0
  %1755 = vmatprep.mubr.bf16.mxu0 0
  %1756 = vmatmul.mubr.bf16.gmra.mxu0 %v1661
  %v1757 = vpop.f32.mrf.mxu0
  %v1758 = vadd.f32 %v1673, %v1757
  %v1759 = vpop.f32.mrf.mxu0
  %v1760 = vpop.f32.mrf.mxu0
  %v1761 = vadd.f32 %v1673, %v1760
  %v1762 = vpop.f32.mrf.mxu0
  %1763 = vmatprep.mubr.bf16.mxu0 0
  %1764 = vmatmul.mubr.bf16.gmra.mxu0 %v1662
  %v1765 = vpop.f32.mrf.mxu0
  %v1766 = vadd.f32 %v1673, %v1765
  %v1767 = vpop.f32.mrf.mxu0
  %v1768 = vpop.f32.mrf.mxu0
  %v1769 = vadd.f32 %v1673, %v1768
  %v1770 = vpop.f32.mrf.mxu0
  %1771 = vmatprep.mubr.bf16.mxu0 0
  %1772 = vmatmul.mubr.bf16.gmra.mxu0 %v1663
  %v1773 = vpop.f32.mrf.mxu0
  %v1774 = vadd.f32 %v1673, %v1773
  %v1775 = vpop.f32.mrf.mxu0
  %v1776 = vpop.f32.mrf.mxu0
  %v1777 = vadd.f32 %v1673, %v1776
  %v1778 = vpop.f32.mrf.mxu0
  %1779 = vmatprep.mubr.bf16.mxu0 0
  %1780 = vmatmul.mubr.bf16.gmra.mxu0 %v1664
  %v1781 = vpop.f32.mrf.mxu0
  %v1782 = vadd.f32 %v1673, %v1781
  %v1783 = vpop.f32.mrf.mxu0
  %v1784 = vpop.f32.mrf.mxu0
  %v1785 = vadd.f32 %v1673, %v1784
  %v1786 = vpop.f32.mrf.mxu0
  %1787 = vmatprep.mubr.bf16.mxu0 0
  %1788 = vmatmul.mubr.bf16.gmra.mxu0 %v1665
  %v1789 = vpop.f32.mrf.mxu0
  %v1790 = vadd.f32 %v1673, %v1789
  %v1791 = vpop.f32.mrf.mxu0
  %v1792 = vpop.f32.mrf.mxu0
  %v1793 = vadd.f32 %v1673, %v1792
  %v1794 = vpop.f32.mrf.mxu0
  %1795 = vmatprep.mubr.bf16.mxu0 0
  %1796 = vmatmul.mubr.bf16.gmra.mxu0 %v1666
  %v1797 = vpop.f32.mrf.mxu0
  %v1798 = vadd.f32 %v1673, %v1797
  %v1799 = vpop.f32.mrf.mxu0
  %v1800 = vpop.f32.mrf.mxu0
  %v1801 = vadd.f32 %v1673, %v1800
  %v1802 = vpop.f32.mrf.mxu0
  %1803 = vmatprep.mubr.bf16.mxu0 0
  %1804 = vmatmul.mubr.bf16.gmra.mxu0 %v1667
  %v1805 = vpop.f32.mrf.mxu0
  %v1806 = vadd.f32 %v1673, %v1805
  %v1807 = vpop.f32.mrf.mxu0
  %v1808 = vpop.f32.mrf.mxu0
  %v1809 = vadd.f32 %v1673, %v1808
  %v1810 = vpop.f32.mrf.mxu0
  %1811 = vmatprep.mubr.bf16.mxu0 0
  %1812 = vmatmul.mubr.bf16.gmra.mxu0 %v1668
  %v1813 = vpop.f32.mrf.mxu0
  %v1814 = vadd.f32 %v1673, %v1813
  %v1815 = vpop.f32.mrf.mxu0
  %v1816 = vpop.f32.mrf.mxu0
  %v1817 = vadd.f32 %v1673, %v1816
  %v1818 = vpop.f32.mrf.mxu0
  %1819 = vdwg.mxu0
  %v1820 = vmax.f32 %v1758, 0.0
  %v1821 = vmax.f32 %v1761, 0.0
  %v1822 = vmax.f32 %v1766, 0.0
  %v1823 = vmax.f32 %v1769, 0.0
  %v1824 = vmax.f32 %v1774, 0.0
  %v1825 = vmax.f32 %v1777, 0.0
  %v1826 = vmax.f32 %v1782, 0.0
  %v1827 = vmax.f32 %v1785, 0.0
  %v1828 = vmax.f32 %v1790, 0.0
  %v1829 = vmax.f32 %v1793, 0.0
  %v1830 = vmax.f32 %v1798, 0.0
  %v1831 = vmax.f32 %v1801, 0.0
  %v1832 = vmax.f32 %v1806, 0.0
  %v1833 = vmax.f32 %v1809, 0.0
  %v1834 = vmax.f32 %v1814, 0.0
  %v1835 = vmax.f32 %v1817, 0.0
  %v1836 = vpack.c.bf16 %v1821, %v1820
  %v1837 = vpack.c.bf16 %v1823, %v1822
  %v1838 = vpack.c.bf16 %v1825, %v1824
  %v1839 = vpack.c.bf16 %v1827, %v1826
  %v1840 = vpack.c.bf16 %v1829, %v1828
  %v1841 = vpack.c.bf16 %v1831, %v1830
  %v1842 = vpack.c.bf16 %v1833, %v1832
  %v1843 = vpack.c.bf16 %v1835, %v1834
  %1844 = vmatprep.subr.bf16.mxu0 0
  %1845 = vmatpush1.bf16.msra.mxu0 %v1843
  %1846 = vmatprep.subr.bf16.mxu0 0
  %1847 = vmatpush1.bf16.msra.mxu0 %v1842
  %1848 = vmatprep.subr.bf16.mxu0 0
  %1849 = vmatpush1.bf16.msra.mxu0 %v1841
  %1850 = vmatprep.subr.bf16.mxu0 0
  %1851 = vmatpush1.bf16.msra.mxu0 %v1840
  %1852 = vmatprep.subr.bf16.mxu0 0
  %1853 = vmatpush1.bf16.msra.mxu0 %v1839
  %1854 = vmatprep.subr.bf16.mxu0 0
  %1855 = vmatpush1.bf16.msra.mxu0 %v1838
  %1856 = vmatprep.subr.bf16.mxu0 0
  %1857 = vmatpush1.bf16.msra.mxu0 %v1837
  %1858 = vmatprep.subr.bf16.mxu0 0
  %1859 = vmatpush1.bf16.msra.mxu0 %v1836
  %1860 = vmatprep.subr.bf16.mxu0 0
  %1861 = vmatpush2.bf16.msra.mxu0 0
  %1862 = vmatprep.subr.bf16.mxu0 0
  %1863 = vmatpush2.bf16.msra.mxu0 0
  %1864 = vmatprep.subr.bf16.mxu0 0
  %1865 = vmatpush2.bf16.msra.mxu0 0
  %1866 = vmatprep.subr.bf16.mxu0 0
  %1867 = vmatpush2.bf16.msra.mxu0 0
  %1868 = vmatprep.subr.bf16.mxu0 0
  %1869 = vmatpush2.bf16.msra.mxu0 0
  %1870 = vmatprep.subr.bf16.mxu0 0
  %1871 = vmatpush2.bf16.msra.mxu0 0
  %1872 = vmatprep.subr.bf16.mxu0 0
  %1873 = vmatpush2.bf16.msra.mxu0 0
  %1874 = vmatprep.subr.bf16.mxu0 0
  %1875 = vmatpush2.bf16.msra.mxu0 0
  %1876 = vmatprep.mubr.bf16.mxu0 0
  %1877 = vmatmul.mubr.bf16.gmra.mxu0 %v64
  %v1878 = vpop.f32.mrf.mxu0
  %v1879 = vadd.f32 0.0, %v1878
  %v1880 = vpop.f32.mrf.mxu0
  %v1881 = vpop.f32.mrf.mxu0
  %v1882 = vpop.f32.mrf.mxu0
  %1883 = vdwg.mxu0
  %v1884 = vpack.c.bf16 %v1879, %v1879
  %s1885 = scalar_lea.vmem %s12, 128
  %v1886 = vld [vmem:[%s1885] sm:$0xf]
  %v1887 = vld [vmem:[%s1885 + $0x4] sm:$0xf]
  %v1888 = vld [vmem:[%s1885 + $0x8] sm:$0xf]
  %v1889 = vld [vmem:[%s1885 + $0xc] sm:$0xf]
  %v1890 = vld [vmem:[%s1885 + $0x10] sm:$0xf]
  %v1891 = vld [vmem:[%s1885 + $0x14] sm:$0xf]
  %v1892 = vld [vmem:[%s1885 + $0x18] sm:$0xf]
  %v1893 = vld [vmem:[%s1885 + $0x1c] sm:$0xf]
  %v1894 = vld [vmem:[%s1885 + $0x20] sm:$0xf]
  %v1895 = vld [vmem:[%s1885 + $0x24] sm:$0xf]
  %v1896 = vld [vmem:[%s1885 + $0x28] sm:$0xf]
  %v1897 = vld [vmem:[%s1885 + $0x2c] sm:$0xf]
  %v1898 = vld [vmem:[%s1885 + $0x30] sm:$0xf]
  %v1899 = vld [vmem:[%s1885 + $0x34] sm:$0xf]
  %v1900 = vld [vmem:[%s1885 + $0x38] sm:$0xf]
  %v1901 = vld [vmem:[%s1885 + $0x3c] sm:$0xf]
  %s1902 = scalar_lea.vmem %s13, 2
  %v1903 = vld [vmem:[%s1902] sm:$0x1]
  %v1905 = vlaneseq
  %v1906 = vshrl.u32 %v1905, 7
  %v1907 = vsub.s32 0, %v1906
  %v1908 = vrot.slane %v1903, %v1907
  %v1926 = vunpack.c.l.b16 %v1886
  %v1927 = vunpack.c.l.b16 %v1887
  %v1928 = vunpack.c.l.b16 %v1888
  %v1929 = vunpack.c.l.b16 %v1889
  %v1930 = vunpack.c.l.b16 %v1890
  %v1931 = vunpack.c.l.b16 %v1891
  %v1932 = vunpack.c.l.b16 %v1892
  %v1933 = vunpack.c.l.b16 %v1893
  %v1934 = vunpack.c.l.b16 %v1894
  %v1935 = vunpack.c.l.b16 %v1895
  %v1936 = vunpack.c.l.b16 %v1896
  %v1937 = vunpack.c.l.b16 %v1897
  %v1938 = vunpack.c.l.b16 %v1898
  %v1939 = vunpack.c.l.b16 %v1899
  %v1940 = vunpack.c.l.b16 %v1900
  %v1941 = vunpack.c.l.b16 %v1901
  %v1942 = vpack.c.b16 %v1927, %v1926
  %v1943 = vpack.c.b16 %v1929, %v1928
  %v1944 = vpack.c.b16 %v1931, %v1930
  %v1945 = vpack.c.b16 %v1933, %v1932
  %v1946 = vpack.c.b16 %v1935, %v1934
  %v1947 = vpack.c.b16 %v1937, %v1936
  %v1948 = vpack.c.b16 %v1939, %v1938
  %v1949 = vpack.c.b16 %v1941, %v1940
  %1958 = vmatprep.subr.bf16.mxu0 0
  %1959 = vmatpush1.bf16.msra.mxu0 %v1949
  %1960 = vmatprep.subr.bf16.mxu0 0
  %1961 = vmatpush1.bf16.msra.mxu0 %v1948
  %1962 = vmatprep.subr.bf16.mxu0 0
  %1963 = vmatpush1.bf16.msra.mxu0 %v1947
  %1964 = vmatprep.subr.bf16.mxu0 0
  %1965 = vmatpush1.bf16.msra.mxu0 %v1946
  %1966 = vmatprep.subr.bf16.mxu0 0
  %1967 = vmatpush1.bf16.msra.mxu0 %v1945
  %1968 = vmatprep.subr.bf16.mxu0 0
  %1969 = vmatpush1.bf16.msra.mxu0 %v1944
  %1970 = vmatprep.subr.bf16.mxu0 0
  %1971 = vmatpush1.bf16.msra.mxu0 %v1943
  %1972 = vmatprep.subr.bf16.mxu0 0
  %1973 = vmatpush1.bf16.msra.mxu0 %v1942
  %1974 = vmatprep.subr.bf16.mxu0 0
  %1975 = vmatpush2.bf16.msra.mxu0 0
  %1976 = vmatprep.subr.bf16.mxu0 0
  %1977 = vmatpush2.bf16.msra.mxu0 0
  %1978 = vmatprep.subr.bf16.mxu0 0
  %1979 = vmatpush2.bf16.msra.mxu0 0
  %1980 = vmatprep.subr.bf16.mxu0 0
  %1981 = vmatpush2.bf16.msra.mxu0 0
  %1982 = vmatprep.subr.bf16.mxu0 0
  %1983 = vmatpush2.bf16.msra.mxu0 0
  %1984 = vmatprep.subr.bf16.mxu0 0
  %1985 = vmatpush2.bf16.msra.mxu0 0
  %1986 = vmatprep.subr.bf16.mxu0 0
  %1987 = vmatpush2.bf16.msra.mxu0 0
  %1988 = vmatprep.subr.bf16.mxu0 0
  %1989 = vmatpush2.bf16.msra.mxu0 0
  %1990 = vmatprep.mubr.bf16.mxu0 0
  %1991 = vmatmul.mubr.bf16.gmra.mxu0 %v1884
  %v1992 = vpop.f32.mrf.mxu0
  %v1993 = vadd.f32 %v1908, %v1992
  %v1994 = vpop.f32.mrf.mxu0
  %v1995 = vpop.f32.mrf.mxu0
  %v1996 = vpop.f32.mrf.mxu0
  %1997 = vdwg.mxu0
  %v1998 = vadd.f32 %v1350, %v1993
  %1999 = vmatprep.subr.bf16.mxu0 0
  %2000 = vmatpush1.bf16.msra.mxu0 %v1843
  %2001 = vmatprep.subr.bf16.mxu0 0
  %2002 = vmatpush1.bf16.msra.mxu0 %v1842
  %2003 = vmatprep.subr.bf16.mxu0 0
  %2004 = vmatpush1.bf16.msra.mxu0 %v1841
  %2005 = vmatprep.subr.bf16.mxu0 0
  %2006 = vmatpush1.bf16.msra.mxu0 %v1840
  %2007 = vmatprep.subr.bf16.mxu0 0
  %2008 = vmatpush1.bf16.msra.mxu0 %v1839
  %2009 = vmatprep.subr.bf16.mxu0 0
  %2010 = vmatpush1.bf16.msra.mxu0 %v1838
  %2011 = vmatprep.subr.bf16.mxu0 0
  %2012 = vmatpush1.bf16.msra.mxu0 %v1837
  %2013 = vmatprep.subr.bf16.mxu0 0
  %2014 = vmatpush1.bf16.msra.mxu0 %v1836
  %2015 = vmatprep.subr.bf16.mxu0 0
  %2016 = vmatpush2.bf16.msra.mxu0 0
  %2017 = vmatprep.subr.bf16.mxu0 0
  %2018 = vmatpush2.bf16.msra.mxu0 0
  %2019 = vmatprep.subr.bf16.mxu0 0
  %2020 = vmatpush2.bf16.msra.mxu0 0
  %2021 = vmatprep.subr.bf16.mxu0 0
  %2022 = vmatpush2.bf16.msra.mxu0 0
  %2023 = vmatprep.subr.bf16.mxu0 0
  %2024 = vmatpush2.bf16.msra.mxu0 0
  %2025 = vmatprep.subr.bf16.mxu0 0
  %2026 = vmatpush2.bf16.msra.mxu0 0
  %2027 = vmatprep.subr.bf16.mxu0 0
  %2028 = vmatpush2.bf16.msra.mxu0 0
  %2029 = vmatprep.subr.bf16.mxu0 0
  %2030 = vmatpush2.bf16.msra.mxu0 0
  %2031 = vmatprep.mubr.bf16.mxu0 0
  %2032 = vmatmul.mubr.bf16.gmra.mxu0 %v691
  %v2033 = vpop.f32.mrf.mxu0
  %v2034 = vadd.f32 0.0, %v2033
  %v2035 = vpop.f32.mrf.mxu0
  %v2036 = vpop.f32.mrf.mxu0
  %v2037 = vadd.f32 0.0, %v2036
  %v2038 = vpop.f32.mrf.mxu0
  %2039 = vmatprep.mubr.bf16.mxu0 0
  %2040 = vmatmul.mubr.bf16.gmra.mxu0 %v692
  %v2041 = vpop.f32.mrf.mxu0
  %v2042 = vadd.f32 0.0, %v2041
  %v2043 = vpop.f32.mrf.mxu0
  %v2044 = vpop.f32.mrf.mxu0
  %v2045 = vadd.f32 0.0, %v2044
  %v2046 = vpop.f32.mrf.mxu0
  %2047 = vmatprep.mubr.bf16.mxu0 0
  %2048 = vmatmul.mubr.bf16.gmra.mxu0 %v693
  %v2049 = vpop.f32.mrf.mxu0
  %v2050 = vadd.f32 0.0, %v2049
  %v2051 = vpop.f32.mrf.mxu0
  %v2052 = vpop.f32.mrf.mxu0
  %v2053 = vadd.f32 0.0, %v2052
  %v2054 = vpop.f32.mrf.mxu0
  %2055 = vmatprep.mubr.bf16.mxu0 0
  %2056 = vmatmul.mubr.bf16.gmra.mxu0 %v694
  %v2057 = vpop.f32.mrf.mxu0
  %v2058 = vadd.f32 0.0, %v2057
  %v2059 = vpop.f32.mrf.mxu0
  %v2060 = vpop.f32.mrf.mxu0
  %v2061 = vadd.f32 0.0, %v2060
  %v2062 = vpop.f32.mrf.mxu0
  %2063 = vmatprep.mubr.bf16.mxu0 0
  %2064 = vmatmul.mubr.bf16.gmra.mxu0 %v695
  %v2065 = vpop.f32.mrf.mxu0
  %v2066 = vadd.f32 0.0, %v2065
  %v2067 = vpop.f32.mrf.mxu0
  %v2068 = vpop.f32.mrf.mxu0
  %v2069 = vadd.f32 0.0, %v2068
  %v2070 = vpop.f32.mrf.mxu0
  %2071 = vmatprep.mubr.bf16.mxu0 0
  %2072 = vmatmul.mubr.bf16.gmra.mxu0 %v696
  %v2073 = vpop.f32.mrf.mxu0
  %v2074 = vadd.f32 0.0, %v2073
  %v2075 = vpop.f32.mrf.mxu0
  %v2076 = vpop.f32.mrf.mxu0
  %v2077 = vadd.f32 0.0, %v2076
  %v2078 = vpop.f32.mrf.mxu0
  %2079 = vmatprep.mubr.bf16.mxu0 0
  %2080 = vmatmul.mubr.bf16.gmra.mxu0 %v697
  %v2081 = vpop.f32.mrf.mxu0
  %v2082 = vadd.f32 0.0, %v2081
  %v2083 = vpop.f32.mrf.mxu0
  %v2084 = vpop.f32.mrf.mxu0
  %v2085 = vadd.f32 0.0, %v2084
  %v2086 = vpop.f32.mrf.mxu0
  %2087 = vmatprep.mubr.bf16.mxu0 0
  %2088 = vmatmul.mubr.bf16.gmra.mxu0 %v698
  %v2089 = vpop.f32.mrf.mxu0
  %v2090 = vadd.f32 0.0, %v2089
  %v2091 = vpop.f32.mrf.mxu0
  %v2092 = vpop.f32.mrf.mxu0
  %v2093 = vadd.f32 0.0, %v2092
  %v2094 = vpop.f32.mrf.mxu0
  %2095 = vdwg.mxu0
  %v2096 = vpack.c.bf16 %v2037, %v2034
  %v2097 = vpack.c.bf16 %v2045, %v2042
  %v2098 = vpack.c.bf16 %v2053, %v2050
  %v2099 = vpack.c.bf16 %v2061, %v2058
  %v2100 = vpack.c.bf16 %v2069, %v2066
  %v2101 = vpack.c.bf16 %v2077, %v2074
  %v2102 = vpack.c.bf16 %v2085, %v2082
  %v2103 = vpack.c.bf16 %v2093, %v2090
  %s2104 = scalar_lea.vmem %s8, 128
  %v2105 = vld [vmem:[%s2104] sm:$0xf]
  %v2106 = vld [vmem:[%s2104 + $0x4] sm:$0xf]
  %v2107 = vld [vmem:[%s2104 + $0x8] sm:$0xf]
  %v2108 = vld [vmem:[%s2104 + $0xc] sm:$0xf]
  %v2109 = vld [vmem:[%s2104 + $0x10] sm:$0xf]
  %v2110 = vld [vmem:[%s2104 + $0x14] sm:$0xf]
  %v2111 = vld [vmem:[%s2104 + $0x18] sm:$0xf]
  %v2112 = vld [vmem:[%s2104 + $0x1c] sm:$0xf]
  %v2113 = vld [vmem:[%s2104 + $0x20] sm:$0xf]
  %v2114 = vld [vmem:[%s2104 + $0x24] sm:$0xf]
  %v2115 = vld [vmem:[%s2104 + $0x28] sm:$0xf]
  %v2116 = vld [vmem:[%s2104 + $0x2c] sm:$0xf]
  %v2117 = vld [vmem:[%s2104 + $0x30] sm:$0xf]
  %v2118 = vld [vmem:[%s2104 + $0x34] sm:$0xf]
  %v2119 = vld [vmem:[%s2104 + $0x38] sm:$0xf]
  %v2120 = vld [vmem:[%s2104 + $0x3c] sm:$0xf]
  %s2121 = scalar_lea.vmem %s9, 2
  %v2122 = vld [vmem:[%s2121] sm:$0x1]
  %s2123 = scalar_lea.vmem %s10, 128
  %v2124 = vld [vmem:[%s2123] sm:$0xf]
  %v2125 = vld [vmem:[%s2123 + $0x4] sm:$0xf]
  %v2126 = vld [vmem:[%s2123 + $0x8] sm:$0xf]
  %v2127 = vld [vmem:[%s2123 + $0xc] sm:$0xf]
  %v2128 = vld [vmem:[%s2123 + $0x10] sm:$0xf]
  %v2129 = vld [vmem:[%s2123 + $0x14] sm:$0xf]
  %v2130 = vld [vmem:[%s2123 + $0x18] sm:$0xf]
  %v2131 = vld [vmem:[%s2123 + $0x1c] sm:$0xf]
  %v2132 = vld [vmem:[%s2123 + $0x20] sm:$0xf]
  %v2133 = vld [vmem:[%s2123 + $0x24] sm:$0xf]
  %v2134 = vld [vmem:[%s2123 + $0x28] sm:$0xf]
  %v2135 = vld [vmem:[%s2123 + $0x2c] sm:$0xf]
  %v2136 = vld [vmem:[%s2123 + $0x30] sm:$0xf]
  %v2137 = vld [vmem:[%s2123 + $0x34] sm:$0xf]
  %v2138 = vld [vmem:[%s2123 + $0x38] sm:$0xf]
  %v2139 = vld [vmem:[%s2123 + $0x3c] sm:$0xf]
  %s2140 = scalar_lea.vmem %s11, 2
  %v2141 = vld [vmem:[%s2140] sm:$0x1]
  %v2143 = vlaneseq
  %v2144 = vshrl.u32 %v2143, 7
  %v2145 = vsub.s32 0, %v2144
  %v2146 = vrot.slane %v2122, %v2145
  %v2164 = vunpack.c.l.b16 %v2105
  %v2165 = vunpack.c.l.b16 %v2106
  %v2166 = vunpack.c.l.b16 %v2107
  %v2167 = vunpack.c.l.b16 %v2108
  %v2168 = vunpack.c.l.b16 %v2109
  %v2169 = vunpack.c.l.b16 %v2110
  %v2170 = vunpack.c.l.b16 %v2111
  %v2171 = vunpack.c.l.b16 %v2112
  %v2172 = vunpack.c.l.b16 %v2113
  %v2173 = vunpack.c.l.b16 %v2114
  %v2174 = vunpack.c.l.b16 %v2115
  %v2175 = vunpack.c.l.b16 %v2116
  %v2176 = vunpack.c.l.b16 %v2117
  %v2177 = vunpack.c.l.b16 %v2118
  %v2178 = vunpack.c.l.b16 %v2119
  %v2179 = vunpack.c.l.b16 %v2120
  %v2180 = vpack.c.b16 %v2165, %v2164
  %v2181 = vpack.c.b16 %v2167, %v2166
  %v2182 = vpack.c.b16 %v2169, %v2168
  %v2183 = vpack.c.b16 %v2171, %v2170
  %v2184 = vpack.c.b16 %v2173, %v2172
  %v2185 = vpack.c.b16 %v2175, %v2174
  %v2186 = vpack.c.b16 %v2177, %v2176
  %v2187 = vpack.c.b16 %v2179, %v2178
  %2196 = vmatprep.subr.bf16.mxu0 0
  %2197 = vmatpush1.bf16.msra.mxu0 %v2187
  %2198 = vmatprep.subr.bf16.mxu0 0
  %2199 = vmatpush1.bf16.msra.mxu0 %v2186
  %2200 = vmatprep.subr.bf16.mxu0 0
  %2201 = vmatpush1.bf16.msra.mxu0 %v2185
  %2202 = vmatprep.subr.bf16.mxu0 0
  %2203 = vmatpush1.bf16.msra.mxu0 %v2184
  %2204 = vmatprep.subr.bf16.mxu0 0
  %2205 = vmatpush1.bf16.msra.mxu0 %v2183
  %2206 = vmatprep.subr.bf16.mxu0 0
  %2207 = vmatpush1.bf16.msra.mxu0 %v2182
  %2208 = vmatprep.subr.bf16.mxu0 0
  %2209 = vmatpush1.bf16.msra.mxu0 %v2181
  %2210 = vmatprep.subr.bf16.mxu0 0
  %2211 = vmatpush1.bf16.msra.mxu0 %v2180
  %2212 = vmatprep.subr.bf16.mxu0 0
  %2213 = vmatpush2.bf16.msra.mxu0 0
  %2214 = vmatprep.subr.bf16.mxu0 0
  %2215 = vmatpush2.bf16.msra.mxu0 0
  %2216 = vmatprep.subr.bf16.mxu0 0
  %2217 = vmatpush2.bf16.msra.mxu0 0
  %2218 = vmatprep.subr.bf16.mxu0 0
  %2219 = vmatpush2.bf16.msra.mxu0 0
  %2220 = vmatprep.subr.bf16.mxu0 0
  %2221 = vmatpush2.bf16.msra.mxu0 0
  %2222 = vmatprep.subr.bf16.mxu0 0
  %2223 = vmatpush2.bf16.msra.mxu0 0
  %2224 = vmatprep.subr.bf16.mxu0 0
  %2225 = vmatpush2.bf16.msra.mxu0 0
  %2226 = vmatprep.subr.bf16.mxu0 0
  %2227 = vmatpush2.bf16.msra.mxu0 0
  %2228 = vmatprep.mubr.bf16.mxu0 0
  %2229 = vmatmul.mubr.bf16.gmra.mxu0 %v2096
  %v2230 = vpop.f32.mrf.mxu0
  %v2231 = vadd.f32 %v2146, %v2230
  %v2232 = vpop.f32.mrf.mxu0
  %v2233 = vpop.f32.mrf.mxu0
  %v2234 = vadd.f32 %v2146, %v2233
  %v2235 = vpop.f32.mrf.mxu0
  %2236 = vmatprep.mubr.bf16.mxu0 0
  %2237 = vmatmul.mubr.bf16.gmra.mxu0 %v2097
  %v2238 = vpop.f32.mrf.mxu0
  %v2239 = vadd.f32 %v2146, %v2238
  %v2240 = vpop.f32.mrf.mxu0
  %v2241 = vpop.f32.mrf.mxu0
  %v2242 = vadd.f32 %v2146, %v2241
  %v2243 = vpop.f32.mrf.mxu0
  %2244 = vmatprep.mubr.bf16.mxu0 0
  %2245 = vmatmul.mubr.bf16.gmra.mxu0 %v2098
  %v2246 = vpop.f32.mrf.mxu0
  %v2247 = vadd.f32 %v2146, %v2246
  %v2248 = vpop.f32.mrf.mxu0
  %v2249 = vpop.f32.mrf.mxu0
  %v2250 = vadd.f32 %v2146, %v2249
  %v2251 = vpop.f32.mrf.mxu0
  %2252 = vmatprep.mubr.bf16.mxu0 0
  %2253 = vmatmul.mubr.bf16.gmra.mxu0 %v2099
  %v2254 = vpop.f32.mrf.mxu0
  %v2255 = vadd.f32 %v2146, %v2254
  %v2256 = vpop.f32.mrf.mxu0
  %v2257 = vpop.f32.mrf.mxu0
  %v2258 = vadd.f32 %v2146, %v2257
  %v2259 = vpop.f32.mrf.mxu0
  %2260 = vmatprep.mubr.bf16.mxu0 0
  %2261 = vmatmul.mubr.bf16.gmra.mxu0 %v2100
  %v2262 = vpop.f32.mrf.mxu0
  %v2263 = vadd.f32 %v2146, %v2262
  %v2264 = vpop.f32.mrf.mxu0
  %v2265 = vpop.f32.mrf.mxu0
  %v2266 = vadd.f32 %v2146, %v2265
  %v2267 = vpop.f32.mrf.mxu0
  %2268 = vmatprep.mubr.bf16.mxu0 0
  %2269 = vmatmul.mubr.bf16.gmra.mxu0 %v2101
  %v2270 = vpop.f32.mrf.mxu0
  %v2271 = vadd.f32 %v2146, %v2270
  %v2272 = vpop.f32.mrf.mxu0
  %v2273 = vpop.f32.mrf.mxu0
  %v2274 = vadd.f32 %v2146, %v2273
  %v2275 = vpop.f32.mrf.mxu0
  %2276 = vmatprep.mubr.bf16.mxu0 0
  %2277 = vmatmul.mubr.bf16.gmra.mxu0 %v2102
  %v2278 = vpop.f32.mrf.mxu0
  %v2279 = vadd.f32 %v2146, %v2278
  %v2280 = vpop.f32.mrf.mxu0
  %v2281 = vpop.f32.mrf.mxu0
  %v2282 = vadd.f32 %v2146, %v2281
  %v2283 = vpop.f32.mrf.mxu0
  %2284 = vmatprep.mubr.bf16.mxu0 0
  %2285 = vmatmul.mubr.bf16.gmra.mxu0 %v2103
  %v2286 = vpop.f32.mrf.mxu0
  %v2287 = vadd.f32 %v2146, %v2286
  %v2288 = vpop.f32.mrf.mxu0
  %v2289 = vpop.f32.mrf.mxu0
  %v2290 = vadd.f32 %v2146, %v2289
  %v2291 = vpop.f32.mrf.mxu0
  %2292 = vdwg.mxu0
  %v2293 = vmax.f32 %v2231, 0.0
  %v2294 = vmax.f32 %v2234, 0.0
  %v2295 = vmax.f32 %v2239, 0.0
  %v2296 = vmax.f32 %v2242, 0.0
  %v2297 = vmax.f32 %v2247, 0.0
  %v2298 = vmax.f32 %v2250, 0.0
  %v2299 = vmax.f32 %v2255, 0.0
  %v2300 = vmax.f32 %v2258, 0.0
  %v2301 = vmax.f32 %v2263, 0.0
  %v2302 = vmax.f32 %v2266, 0.0
  %v2303 = vmax.f32 %v2271, 0.0
  %v2304 = vmax.f32 %v2274, 0.0
  %v2305 = vmax.f32 %v2279, 0.0
  %v2306 = vmax.f32 %v2282, 0.0
  %v2307 = vmax.f32 %v2287, 0.0
  %v2308 = vmax.f32 %v2290, 0.0
  %v2309 = vpack.c.bf16 %v2294, %v2293
  %v2310 = vpack.c.bf16 %v2296, %v2295
  %v2311 = vpack.c.bf16 %v2298, %v2297
  %v2312 = vpack.c.bf16 %v2300, %v2299
  %v2313 = vpack.c.bf16 %v2302, %v2301
  %v2314 = vpack.c.bf16 %v2304, %v2303
  %v2315 = vpack.c.bf16 %v2306, %v2305
  %v2316 = vpack.c.bf16 %v2308, %v2307
  %v2318 = vlaneseq
  %v2319 = vshrl.u32 %v2318, 7
  %v2320 = vsub.s32 0, %v2319
  %v2321 = vrot.slane %v2141, %v2320
  %v2339 = vunpack.c.l.b16 %v2124
  %v2340 = vunpack.c.l.b16 %v2125
  %v2341 = vunpack.c.l.b16 %v2126
  %v2342 = vunpack.c.l.b16 %v2127
  %v2343 = vunpack.c.l.b16 %v2128
  %v2344 = vunpack.c.l.b16 %v2129
  %v2345 = vunpack.c.l.b16 %v2130
  %v2346 = vunpack.c.l.b16 %v2131
  %v2347 = vunpack.c.l.b16 %v2132
  %v2348 = vunpack.c.l.b16 %v2133
  %v2349 = vunpack.c.l.b16 %v2134
  %v2350 = vunpack.c.l.b16 %v2135
  %v2351 = vunpack.c.l.b16 %v2136
  %v2352 = vunpack.c.l.b16 %v2137
  %v2353 = vunpack.c.l.b16 %v2138
  %v2354 = vunpack.c.l.b16 %v2139
  %v2355 = vpack.c.b16 %v2340, %v2339
  %v2356 = vpack.c.b16 %v2342, %v2341
  %v2357 = vpack.c.b16 %v2344, %v2343
  %v2358 = vpack.c.b16 %v2346, %v2345
  %v2359 = vpack.c.b16 %v2348, %v2347
  %v2360 = vpack.c.b16 %v2350, %v2349
  %v2361 = vpack.c.b16 %v2352, %v2351
  %v2362 = vpack.c.b16 %v2354, %v2353
  %2371 = vmatprep.subr.bf16.mxu0 0
  %2372 = vmatpush1.bf16.msra.mxu0 %v2362
  %2373 = vmatprep.subr.bf16.mxu0 0
  %2374 = vmatpush1.bf16.msra.mxu0 %v2361
  %2375 = vmatprep.subr.bf16.mxu0 0
  %2376 = vmatpush1.bf16.msra.mxu0 %v2360
  %2377 = vmatprep.subr.bf16.mxu0 0
  %2378 = vmatpush1.bf16.msra.mxu0 %v2359
  %2379 = vmatprep.subr.bf16.mxu0 0
  %2380 = vmatpush1.bf16.msra.mxu0 %v2358
  %2381 = vmatprep.subr.bf16.mxu0 0
  %2382 = vmatpush1.bf16.msra.mxu0 %v2357
  %2383 = vmatprep.subr.bf16.mxu0 0
  %2384 = vmatpush1.bf16.msra.mxu0 %v2356
  %2385 = vmatprep.subr.bf16.mxu0 0
  %2386 = vmatpush1.bf16.msra.mxu0 %v2355
  %2387 = vmatprep.subr.bf16.mxu0 0
  %2388 = vmatpush2.bf16.msra.mxu0 0
  %2389 = vmatprep.subr.bf16.mxu0 0
  %2390 = vmatpush2.bf16.msra.mxu0 0
  %2391 = vmatprep.subr.bf16.mxu0 0
  %2392 = vmatpush2.bf16.msra.mxu0 0
  %2393 = vmatprep.subr.bf16.mxu0 0
  %2394 = vmatpush2.bf16.msra.mxu0 0
  %2395 = vmatprep.subr.bf16.mxu0 0
  %2396 = vmatpush2.bf16.msra.mxu0 0
  %2397 = vmatprep.subr.bf16.mxu0 0
  %2398 = vmatpush2.bf16.msra.mxu0 0
  %2399 = vmatprep.subr.bf16.mxu0 0
  %2400 = vmatpush2.bf16.msra.mxu0 0
  %2401 = vmatprep.subr.bf16.mxu0 0
  %2402 = vmatpush2.bf16.msra.mxu0 0
  %2403 = vmatprep.mubr.bf16.mxu0 0
  %2404 = vmatmul.mubr.bf16.gmra.mxu0 %v2309
  %v2405 = vpop.f32.mrf.mxu0
  %v2406 = vadd.f32 %v2321, %v2405
  %v2407 = vpop.f32.mrf.mxu0
  %v2408 = vpop.f32.mrf.mxu0
  %v2409 = vadd.f32 %v2321, %v2408
  %v2410 = vpop.f32.mrf.mxu0
  %2411 = vmatprep.mubr.bf16.mxu0 0
  %2412 = vmatmul.mubr.bf16.gmra.mxu0 %v2310
  %v2413 = vpop.f32.mrf.mxu0
  %v2414 = vadd.f32 %v2321, %v2413
  %v2415 = vpop.f32.mrf.mxu0
  %v2416 = vpop.f32.mrf.mxu0
  %v2417 = vadd.f32 %v2321, %v2416
  %v2418 = vpop.f32.mrf.mxu0
  %2419 = vmatprep.mubr.bf16.mxu0 0
  %2420 = vmatmul.mubr.bf16.gmra.mxu0 %v2311
  %v2421 = vpop.f32.mrf.mxu0
  %v2422 = vadd.f32 %v2321, %v2421
  %v2423 = vpop.f32.mrf.mxu0
  %v2424 = vpop.f32.mrf.mxu0
  %v2425 = vadd.f32 %v2321, %v2424
  %v2426 = vpop.f32.mrf.mxu0
  %2427 = vmatprep.mubr.bf16.mxu0 0
  %2428 = vmatmul.mubr.bf16.gmra.mxu0 %v2312
  %v2429 = vpop.f32.mrf.mxu0
  %v2430 = vadd.f32 %v2321, %v2429
  %v2431 = vpop.f32.mrf.mxu0
  %v2432 = vpop.f32.mrf.mxu0
  %v2433 = vadd.f32 %v2321, %v2432
  %v2434 = vpop.f32.mrf.mxu0
  %2435 = vmatprep.mubr.bf16.mxu0 0
  %2436 = vmatmul.mubr.bf16.gmra.mxu0 %v2313
  %v2437 = vpop.f32.mrf.mxu0
  %v2438 = vadd.f32 %v2321, %v2437
  %v2439 = vpop.f32.mrf.mxu0
  %v2440 = vpop.f32.mrf.mxu0
  %v2441 = vadd.f32 %v2321, %v2440
  %v2442 = vpop.f32.mrf.mxu0
  %2443 = vmatprep.mubr.bf16.mxu0 0
  %2444 = vmatmul.mubr.bf16.gmra.mxu0 %v2314
  %v2445 = vpop.f32.mrf.mxu0
  %v2446 = vadd.f32 %v2321, %v2445
  %v2447 = vpop.f32.mrf.mxu0
  %v2448 = vpop.f32.mrf.mxu0
  %v2449 = vadd.f32 %v2321, %v2448
  %v2450 = vpop.f32.mrf.mxu0
  %2451 = vmatprep.mubr.bf16.mxu0 0
  %2452 = vmatmul.mubr.bf16.gmra.mxu0 %v2315
  %v2453 = vpop.f32.mrf.mxu0
  %v2454 = vadd.f32 %v2321, %v2453
  %v2455 = vpop.f32.mrf.mxu0
  %v2456 = vpop.f32.mrf.mxu0
  %v2457 = vadd.f32 %v2321, %v2456
  %v2458 = vpop.f32.mrf.mxu0
  %2459 = vmatprep.mubr.bf16.mxu0 0
  %2460 = vmatmul.mubr.bf16.gmra.mxu0 %v2316
  %v2461 = vpop.f32.mrf.mxu0
  %v2462 = vadd.f32 %v2321, %v2461
  %v2463 = vpop.f32.mrf.mxu0
  %v2464 = vpop.f32.mrf.mxu0
  %v2465 = vadd.f32 %v2321, %v2464
  %v2466 = vpop.f32.mrf.mxu0
  %2467 = vdwg.mxu0
  %v2468 = vmax.f32 %v2406, 0.0
  %v2469 = vmax.f32 %v2409, 0.0
  %v2470 = vmax.f32 %v2414, 0.0
  %v2471 = vmax.f32 %v2417, 0.0
  %v2472 = vmax.f32 %v2422, 0.0
  %v2473 = vmax.f32 %v2425, 0.0
  %v2474 = vmax.f32 %v2430, 0.0
  %v2475 = vmax.f32 %v2433, 0.0
  %v2476 = vmax.f32 %v2438, 0.0
  %v2477 = vmax.f32 %v2441, 0.0
  %v2478 = vmax.f32 %v2446, 0.0
  %v2479 = vmax.f32 %v2449, 0.0
  %v2480 = vmax.f32 %v2454, 0.0
  %v2481 = vmax.f32 %v2457, 0.0
  %v2482 = vmax.f32 %v2462, 0.0
  %v2483 = vmax.f32 %v2465, 0.0
  %v2484 = vpack.c.bf16 %v2469, %v2468
  %v2485 = vpack.c.bf16 %v2471, %v2470
  %v2486 = vpack.c.bf16 %v2473, %v2472
  %v2487 = vpack.c.bf16 %v2475, %v2474
  %v2488 = vpack.c.bf16 %v2477, %v2476
  %v2489 = vpack.c.bf16 %v2479, %v2478
  %v2490 = vpack.c.bf16 %v2481, %v2480
  %v2491 = vpack.c.bf16 %v2483, %v2482
  %2492 = vmatprep.subr.bf16.mxu0 0
  %2493 = vmatpush1.bf16.msra.mxu0 %v2491
  %2494 = vmatprep.subr.bf16.mxu0 0
  %2495 = vmatpush1.bf16.msra.mxu0 %v2490
  %2496 = vmatprep.subr.bf16.mxu0 0
  %2497 = vmatpush1.bf16.msra.mxu0 %v2489
  %2498 = vmatprep.subr.bf16.mxu0 0
  %2499 = vmatpush1.bf16.msra.mxu0 %v2488
  %2500 = vmatprep.subr.bf16.mxu0 0
  %2501 = vmatpush1.bf16.msra.mxu0 %v2487
  %2502 = vmatprep.subr.bf16.mxu0 0
  %2503 = vmatpush1.bf16.msra.mxu0 %v2486
  %2504 = vmatprep.subr.bf16.mxu0 0
  %2505 = vmatpush1.bf16.msra.mxu0 %v2485
  %2506 = vmatprep.subr.bf16.mxu0 0
  %2507 = vmatpush1.bf16.msra.mxu0 %v2484
  %2508 = vmatprep.subr.bf16.mxu0 0
  %2509 = vmatpush2.bf16.msra.mxu0 0
  %2510 = vmatprep.subr.bf16.mxu0 0
  %2511 = vmatpush2.bf16.msra.mxu0 0
  %2512 = vmatprep.subr.bf16.mxu0 0
  %2513 = vmatpush2.bf16.msra.mxu0 0
  %2514 = vmatprep.subr.bf16.mxu0 0
  %2515 = vmatpush2.bf16.msra.mxu0 0
  %2516 = vmatprep.subr.bf16.mxu0 0
  %2517 = vmatpush2.bf16.msra.mxu0 0
  %2518 = vmatprep.subr.bf16.mxu0 0
  %2519 = vmatpush2.bf16.msra.mxu0 0
  %2520 = vmatprep.subr.bf16.mxu0 0
  %2521 = vmatpush2.bf16.msra.mxu0 0
  %2522 = vmatprep.subr.bf16.mxu0 0
  %2523 = vmatpush2.bf16.msra.mxu0 0
  %2524 = vmatprep.mubr.bf16.mxu0 0
  %2525 = vmatmul.mubr.bf16.gmra.mxu0 %v64
  %v2526 = vpop.f32.mrf.mxu0
  %v2527 = vadd.f32 0.0, %v2526
  %v2528 = vpop.f32.mrf.mxu0
  %v2529 = vpop.f32.mrf.mxu0
  %v2530 = vpop.f32.mrf.mxu0
  %2531 = vdwg.mxu0
  %v2532 = vpack.c.bf16 %v2527, %v2527
  %s2533 = scalar_lea.vmem %s12, 192
  %v2534 = vld [vmem:[%s2533] sm:$0xf]
  %v2535 = vld [vmem:[%s2533 + $0x4] sm:$0xf]
  %v2536 = vld [vmem:[%s2533 + $0x8] sm:$0xf]
  %v2537 = vld [vmem:[%s2533 + $0xc] sm:$0xf]
  %v2538 = vld [vmem:[%s2533 + $0x10] sm:$0xf]
  %v2539 = vld [vmem:[%s2533 + $0x14] sm:$0xf]
  %v2540 = vld [vmem:[%s2533 + $0x18] sm:$0xf]
  %v2541 = vld [vmem:[%s2533 + $0x1c] sm:$0xf]
  %v2542 = vld [vmem:[%s2533 + $0x20] sm:$0xf]
  %v2543 = vld [vmem:[%s2533 + $0x24] sm:$0xf]
  %v2544 = vld [vmem:[%s2533 + $0x28] sm:$0xf]
  %v2545 = vld [vmem:[%s2533 + $0x2c] sm:$0xf]
  %v2546 = vld [vmem:[%s2533 + $0x30] sm:$0xf]
  %v2547 = vld [vmem:[%s2533 + $0x34] sm:$0xf]
  %v2548 = vld [vmem:[%s2533 + $0x38] sm:$0xf]
  %v2549 = vld [vmem:[%s2533 + $0x3c] sm:$0xf]
  %s2550 = scalar_lea.vmem %s13, 3
  %v2551 = vld [vmem:[%s2550] sm:$0x1]
  %v2553 = vlaneseq
  %v2554 = vshrl.u32 %v2553, 7
  %v2555 = vsub.s32 0, %v2554
  %v2556 = vrot.slane %v2551, %v2555
  %v2574 = vunpack.c.l.b16 %v2534
  %v2575 = vunpack.c.l.b16 %v2535
  %v2576 = vunpack.c.l.b16 %v2536
  %v2577 = vunpack.c.l.b16 %v2537
  %v2578 = vunpack.c.l.b16 %v2538
  %v2579 = vunpack.c.l.b16 %v2539
  %v2580 = vunpack.c.l.b16 %v2540
  %v2581 = vunpack.c.l.b16 %v2541
  %v2582 = vunpack.c.l.b16 %v2542
  %v2583 = vunpack.c.l.b16 %v2543
  %v2584 = vunpack.c.l.b16 %v2544
  %v2585 = vunpack.c.l.b16 %v2545
  %v2586 = vunpack.c.l.b16 %v2546
  %v2587 = vunpack.c.l.b16 %v2547
  %v2588 = vunpack.c.l.b16 %v2548
  %v2589 = vunpack.c.l.b16 %v2549
  %v2590 = vpack.c.b16 %v2575, %v2574
  %v2591 = vpack.c.b16 %v2577, %v2576
  %v2592 = vpack.c.b16 %v2579, %v2578
  %v2593 = vpack.c.b16 %v2581, %v2580
  %v2594 = vpack.c.b16 %v2583, %v2582
  %v2595 = vpack.c.b16 %v2585, %v2584
  %v2596 = vpack.c.b16 %v2587, %v2586
  %v2597 = vpack.c.b16 %v2589, %v2588
  %2606 = vmatprep.subr.bf16.mxu0 0
  %2607 = vmatpush1.bf16.msra.mxu0 %v2597
  %2608 = vmatprep.subr.bf16.mxu0 0
  %2609 = vmatpush1.bf16.msra.mxu0 %v2596
  %2610 = vmatprep.subr.bf16.mxu0 0
  %2611 = vmatpush1.bf16.msra.mxu0 %v2595
  %2612 = vmatprep.subr.bf16.mxu0 0
  %2613 = vmatpush1.bf16.msra.mxu0 %v2594
  %2614 = vmatprep.subr.bf16.mxu0 0
  %2615 = vmatpush1.bf16.msra.mxu0 %v2593
  %2616 = vmatprep.subr.bf16.mxu0 0
  %2617 = vmatpush1.bf16.msra.mxu0 %v2592
  %2618 = vmatprep.subr.bf16.mxu0 0
  %2619 = vmatpush1.bf16.msra.mxu0 %v2591
  %2620 = vmatprep.subr.bf16.mxu0 0
  %2621 = vmatpush1.bf16.msra.mxu0 %v2590
  %2622 = vmatprep.subr.bf16.mxu0 0
  %2623 = vmatpush2.bf16.msra.mxu0 0
  %2624 = vmatprep.subr.bf16.mxu0 0
  %2625 = vmatpush2.bf16.msra.mxu0 0
  %2626 = vmatprep.subr.bf16.mxu0 0
  %2627 = vmatpush2.bf16.msra.mxu0 0
  %2628 = vmatprep.subr.bf16.mxu0 0
  %2629 = vmatpush2.bf16.msra.mxu0 0
  %2630 = vmatprep.subr.bf16.mxu0 0
  %2631 = vmatpush2.bf16.msra.mxu0 0
  %2632 = vmatprep.subr.bf16.mxu0 0
  %2633 = vmatpush2.bf16.msra.mxu0 0
  %2634 = vmatprep.subr.bf16.mxu0 0
  %2635 = vmatpush2.bf16.msra.mxu0 0
  %2636 = vmatprep.subr.bf16.mxu0 0
  %2637 = vmatpush2.bf16.msra.mxu0 0
  %2638 = vmatprep.mubr.bf16.mxu0 0
  %2639 = vmatmul.mubr.bf16.gmra.mxu0 %v2532
  %v2640 = vpop.f32.mrf.mxu0
  %v2641 = vadd.f32 %v2556, %v2640
  %v2642 = vpop.f32.mrf.mxu0
  %v2643 = vpop.f32.mrf.mxu0
  %v2644 = vpop.f32.mrf.mxu0
  %2645 = vdwg.mxu0
  %v2646 = vadd.f32 %v1998, %v2641
  %v2647 = vsub.f32 0.0, %v2646
  %v2648 = vmul.f32 %v2647, 1.442695
  %v2649 = vpow.pop %v2648
  %v2650 = vadd.f32 %v2649, 1.0
  %v2651 = vrcp.pop %v2650
  %2652 = vst [vmem:[%s14] sm:$0xff] %v2651
  // Predicated region
  $region58: #{gin_forward.1} parent=0 // pred_check
    _
  $region59: #{gin_forward.1} parent=0 // pred_check_branch
    %2654 = sbr.rel (0) target = $region61
  $region60: #{gin_forward.1} parent=0 // pred_region
    _
  $region61: #{gin_forward.1} parent=0 // pred_fallthru
    _
  // Predicated region
  $region62: #{gin_forward.1} parent=0 // pred_check
    _
  $region63: #{gin_forward.1} parent=0 // pred_check_branch
    %2656 = sbr.rel (0) target = $region65
  $region64: #{gin_forward.1} parent=0 // pred_region
    _
  $region65: #{gin_forward.1} parent=0 // pred_fallthru
    _

</llo_original>
